<compile_context>
chip_gen: v7x
topology: tpu7x:2x2x1
jax: 0.10.0
libtpu: 0.0.40
codegen_flags: <defaults>
</compile_context>

<pallas_src>
import jax
import jax.numpy as jnp
from jax import lax
from jax.experimental import pallas as pl
from jax.experimental.pallas import tpu as pltpu


def _lstm_kernel(x_ref, wih_ref, whh_ref, bias_ref, wlin_ref, blin_ref,
                 out_ref, gx_ref):
    # x_ref:    (T, I)      input sequence (batch = 1)
    # wih_ref:  (I, 4Hp)    input->hidden weights (transposed, gate-permuted, padded), f32
    # whh_ref:  (Hp, 4Hp)   hidden->hidden weights (transposed, gate-permuted, padded), bf16
    # bias_ref: (1, 4Hp)    combined bias (b_ih + b_hh), f32
    # wlin_ref: (Hp, Op)    final linear weights (transposed, padded), f32
    # blin_ref: (1, Op)     final linear bias (padded), f32
    # out_ref:  (1, Op)     prediction for the last timestep (padded lanes)
    # gx_ref:   (T, 4Hp)    VMEM scratch: precomputed input projection
    T = x_ref.shape[0]
    Hp = whh_ref.shape[0]

    # Hoisted input projection (+ bias) for ALL timesteps: one matmul,
    # off the serial recurrence path.
    gx_ref[...] = (
        jnp.dot(x_ref[...], wih_ref[...], preferred_element_type=jnp.float32)
        + bias_ref[...]
    )

    whh = whh_ref[...]  # bf16, stays resident in vregs/VMEM

    def body(t, carry):
        h, c = carry  # (1, Hp) f32
        g_x = gx_ref[pl.ds(t, 1), :]  # (1, 4Hp) aligned row load
        gates = g_x + jnp.dot(h.astype(jnp.bfloat16), whh,
                              preferred_element_type=jnp.float32)  # (1, 4Hp)
        # Gate order (permuted in wrapper) is [i, f, o, g]:
        # one sigmoid over the contiguous first 3*Hp lanes, one tanh on the rest.
        s = jax.nn.sigmoid(gates[:, : 3 * Hp])
        i_g = s[:, 0 * Hp:1 * Hp]
        f_g = s[:, 1 * Hp:2 * Hp]
        o_g = s[:, 2 * Hp:3 * Hp]
        g_g = jnp.tanh(gates[:, 3 * Hp:])
        c_new = f_g * c + i_g * g_g
        h_new = o_g * jnp.tanh(c_new)
        return h_new, c_new

    h0 = jnp.zeros((1, Hp), jnp.float32)
    c0 = jnp.zeros((1, Hp), jnp.float32)
    # Fully unrolled: gives the scheduler cross-iteration visibility.
    h_last, _ = lax.fori_loop(0, T, body, (h0, c0), unroll=True)

    out_ref[...] = (
        jnp.dot(h_last, wlin_ref[...], preferred_element_type=jnp.float32)
        + blin_ref[...]
    ).astype(out_ref.dtype)


def lstm_model_forward(x_btI, params):
    """x_btI: (B, T, I) batch-first like PyTorch (B must be 1). Returns (B, O)."""
    w_ih, w_hh, b_ih, b_hh, w_lin, b_lin = (
        params["w_ih"], params["w_hh"], params["b_ih"],
        params["b_hh"], params["w_lin"], params["b_lin"],
    )
    B, T, I = x_btI.shape
    assert B == 1, "module's (1,1,H) zero hidden_cell forces batch=1"
    H = w_hh.shape[1]
    O = w_lin.shape[0]
    Hp = max(128, ((H + 127) // 128) * 128)   # lane-aligned hidden size
    Op = max(128, ((O + 127) // 128) * 128)   # lane-dense output store

    # PyTorch gate order along 4H is [i, f, g, o]; permute to [i, f, o, g]
    # so the three sigmoid gates are contiguous.
    perm = (0, 1, 3, 2)

    def gate_blocks(w):
        return [w[g * H:(g + 1) * H] for g in perm]

    # W_ih^T: (I, 4Hp); padded gate rows are zero -> padded units get 0 pre-act.
    wih_t = jnp.concatenate(
        [jnp.pad(blk, ((0, Hp - H), (0, 0))) for blk in gate_blocks(w_ih)],
        axis=0).T.astype(jnp.float32)                           # (I, 4Hp)

    # W_hh^T: (Hp, 4Hp), bf16 for the MXU-native recurrent matmul.
    whh_t = jnp.concatenate(
        [jnp.pad(blk, ((0, Hp - H), (0, Hp - H))) for blk in gate_blocks(w_hh)],
        axis=0).T.astype(jnp.bfloat16)                          # (Hp, 4Hp)

    # Combined bias (b_ih + b_hh), gate-permuted and zero-padded.
    b = b_ih + b_hh
    bias = jnp.concatenate(
        [jnp.pad(b[g * H:(g + 1) * H], (0, Hp - H)) for g in perm]
    ).reshape(1, 4 * Hp).astype(jnp.float32)                    # (1, 4Hp)

    # Final linear, zero-padded: padded h rows and padded out columns are zero.
    wlin_t = jnp.pad(w_lin.T, ((0, Hp - H), (0, Op - O))).astype(jnp.float32)  # (Hp, Op)
    blin = jnp.pad(b_lin, (0, Op - O)).reshape(1, Op).astype(jnp.float32)      # (1, Op)

    x2d = x_btI[0].astype(jnp.float32)                          # (T, I)

    full = lambda shape: pl.BlockSpec(shape, lambda: (0,) * len(shape))

    out_p = pl.pallas_call(
        _lstm_kernel,
        out_shape=jax.ShapeDtypeStruct((1, Op), jnp.float32),
        in_specs=[
            full((T, I)),
            full((I, 4 * Hp)),
            full((Hp, 4 * Hp)),
            full((1, 4 * Hp)),
            full((Hp, Op)),
            full((1, Op)),
        ],
        out_specs=full((1, Op)),
        scratch_shapes=[pltpu.VMEM((T, 4 * Hp), jnp.float32)],
    )(x2d, wih_t, whh_t, bias, wlin_t, blin)

    return out_p[:, :O]


def _reference_forward(x_btI, params):
    """Pure-JAX f32 reference mirroring torch.nn.LSTM + Linear semantics."""
    w_ih, w_hh, b_ih, b_hh, w_lin, b_lin = (
        params["w_ih"], params["w_hh"], params["b_ih"],
        params["b_hh"], params["w_lin"], params["b_lin"],
    )
    B, T, I = x_btI.shape
    H = w_hh.shape[1]
    h = jnp.zeros((B, H), jnp.float32)
    c = jnp.zeros((B, H), jnp.float32)
    for t in range(T):
        x_t = x_btI[:, t, :]
        gates = x_t @ w_ih.T + h @ w_hh.T + b_ih + b_hh
        i = jax.nn.sigmoid(gates[:, 0 * H:1 * H])
        f = jax.nn.sigmoid(gates[:, 1 * H:2 * H])
        g = jnp.tanh(gates[:, 2 * H:3 * H])
        o = jax.nn.sigmoid(gates[:, 3 * H:4 * H])
        c = f * c + i * g
        h = o * jnp.tanh(c)
    return h @ w_lin.T + b_lin


def init_params(key, input_size, hidden, output_size):
    """Deterministic init matching torch shapes (uniform(-1/sqrt(H), 1/sqrt(H)))."""
    k = 1.0 / jnp.sqrt(hidden)
    keys = jax.random.split(key, 6)
    u = lambda kk, shape: jax.random.uniform(kk, shape, jnp.float32, -k, k)
    return {
        "w_ih": u(keys[0], (4 * hidden, input_size)),
        "w_hh": u(keys[1], (4 * hidden, hidden)),
        "b_ih": u(keys[2], (4 * hidden,)),
        "b_hh": u(keys[3], (4 * hidden,)),
        "w_lin": u(keys[4], (output_size, hidden)),
        "b_lin": u(keys[5], (output_size,)),
    }


if __name__ == "__main__":
    INPUT_SIZE = 1
    HIDDEN = 100      # matches the module default hidden_layer_size=100 (padded to 128 internally)
    OUTPUT_SIZE = 1
    BATCH = 1         # forced by the module's (1, 1, H) zero hidden_cell
    SEQ = 8

    key = jax.random.PRNGKey(0)
    pkey, xkey = jax.random.split(key)
    params = init_params(pkey, INPUT_SIZE, HIDDEN, OUTPUT_SIZE)
    x = jax.random.normal(xkey, (BATCH, SEQ, INPUT_SIZE), jnp.float32)

    out = jax.block_until_ready(lstm_model_forward(x, params))
    ref = _reference_forward(x, params)

    assert out.shape == (BATCH, OUTPUT_SIZE)
    # bf16 recurrent weights -> compare against the f32 reference with a
    # correspondingly relaxed tolerance (observed error is O(1e-3)).
    assert jnp.allclose(out, ref, atol=2e-2, rtol=2e-2), (out, ref)

    print("KERNEL_OK")
</pallas_src>

<mosaic_0001>
module attributes {stable_mosaic.version = 11 : i64} {
  func.func @_lstm_kernel(%arg0: memref<8x1xf32, #tpu.memory_space<vmem>>, %arg1: memref<1x512xf32, #tpu.memory_space<vmem>>, %arg2: memref<128x512xbf16, #tpu.memory_space<vmem>>, %arg3: memref<1x512xf32, #tpu.memory_space<vmem>>, %arg4: memref<128x128xf32, #tpu.memory_space<vmem>>, %arg5: memref<1x128xf32, #tpu.memory_space<vmem>>, %arg6: memref<1x128xf32, #tpu.memory_space<vmem>>, %arg7: memref<8x512xf32, #tpu.memory_space<vmem>>) attributes {dimension_semantics = [], scalar_prefetch = 0 : i64, scratch_operands = 1 : i64, tpu.core_type = #tpu.core_type<tc>} {
    %c0 = arith.constant 0 : index
    %c0_0 = arith.constant 0 : index
    %0 = vector.load %arg0[%c0, %c0_0] : memref<8x1xf32, #tpu.memory_space<vmem>>, vector<8x1xf32>
    %c0_1 = arith.constant 0 : index
    %c0_2 = arith.constant 0 : index
    %1 = vector.load %arg1[%c0_1, %c0_2] : memref<1x512xf32, #tpu.memory_space<vmem>>, vector<1x512xf32>
    %cst = arith.constant dense<0.000000e+00> : vector<8x512xf32>
    %2 = tpu.matmul %0, %1, %cst {dimension_numbers = #tpu.dot_dimension_numbers<[1], [0], [0], [1], [0, 0, 1, 1], [], []>} : vector<8x1xf32>, vector<1x512xf32>, vector<8x512xf32> -> vector<8x512xf32>
    %c0_3 = arith.constant 0 : index
    %c0_4 = arith.constant 0 : index
    %3 = vector.load %arg3[%c0_3, %c0_4] : memref<1x512xf32, #tpu.memory_space<vmem>>, vector<1x512xf32>
    %4 = vector.broadcast %3 : vector<1x512xf32> to vector<8x512xf32>
    %5 = arith.addf %2, %4 : vector<8x512xf32>
    %c0_5 = arith.constant 0 : index
    %c0_6 = arith.constant 0 : index
    %6 = vector.load %arg7[%c0_5, %c0_6] : memref<8x512xf32, #tpu.memory_space<vmem>>, vector<8x512xf32>
    tpu.vector_store %arg7[%c0_5, %c0_6], %5 {strides = array<i32>} : memref<8x512xf32, #tpu.memory_space<vmem>>, vector<8x512xf32>,
    %c0_7 = arith.constant 0 : index
    %c0_8 = arith.constant 0 : index
    %7 = vector.load %arg2[%c0_7, %c0_8] : memref<128x512xbf16, #tpu.memory_space<vmem>>, vector<128x512xbf16>
    %cst_9 = arith.constant 0.000000e+00 : f32
    %8 = vector.broadcast %cst_9 : f32 to vector<1x128xf32>
    %cst_10 = arith.constant 0.000000e+00 : f32
    %9 = vector.broadcast %cst_10 : f32 to vector<1x128xf32>
    %c0_i32 = arith.constant 0 : i32
    %10 = arith.index_cast %c0_i32 : i32 to index
    %c0_11 = arith.constant 0 : index
    %11 = vector.load %arg7[%10, %c0_11] : memref<8x512xf32, #tpu.memory_space<vmem>>, vector<1x512xf32>
    %12 = arith.truncf %8 : vector<1x128xf32> to vector<1x128xbf16>
    %cst_12 = arith.constant dense<0.000000e+00> : vector<1x512xf32>
    %13 = tpu.matmul %12, %7, %cst_12 {dimension_numbers = #tpu.dot_dimension_numbers<[1], [0], [0], [1], [0, 0, 1, 1], [], []>} : vector<1x128xbf16>, vector<128x512xbf16>, vector<1x512xf32> -> vector<1x512xf32>
    %14 = arith.addf %11, %13 : vector<1x512xf32>
    %15 = vector.extract_strided_slice %14 {offsets = [0, 0], sizes = [1, 384], strides = [1, 1]} : vector<1x512xf32> to vector<1x384xf32>
    %16 = arith.negf %15 : vector<1x384xf32>
    %17 = math.exp %16 : vector<1x384xf32>
    %cst_13 = arith.constant 1.000000e+00 : f32
    %18 = vector.broadcast %cst_13 : f32 to vector<1x384xf32>
    %19 = arith.addf %18, %17 : vector<1x384xf32>
    %20 = arith.divf %18, %19 : vector<1x384xf32>
    %21 = vector.extract_strided_slice %20 {offsets = [0, 0], sizes = [1, 128], strides = [1, 1]} : vector<1x384xf32> to vector<1x128xf32>
    %22 = vector.extract_strided_slice %20 {offsets = [0, 128], sizes = [1, 128], strides = [1, 1]} : vector<1x384xf32> to vector<1x128xf32>
    %23 = vector.extract_strided_slice %20 {offsets = [0, 256], sizes = [1, 128], strides = [1, 1]} : vector<1x384xf32> to vector<1x128xf32>
    %24 = vector.extract_strided_slice %14 {offsets = [0, 384], sizes = [1, 128], strides = [1, 1]} : vector<1x512xf32> to vector<1x128xf32>
    %25 = math.tanh %24 : vector<1x128xf32>
    %26 = arith.mulf %22, %9 : vector<1x128xf32>
    %27 = arith.mulf %21, %25 : vector<1x128xf32>
    %28 = arith.addf %26, %27 : vector<1x128xf32>
    %29 = math.tanh %28 : vector<1x128xf32>
    %30 = arith.mulf %23, %29 : vector<1x128xf32>
    %c1_i32 = arith.constant 1 : i32
    %31 = arith.index_cast %c1_i32 : i32 to index
    %c0_14 = arith.constant 0 : index
    %32 = vector.load %arg7[%31, %c0_14] : memref<8x512xf32, #tpu.memory_space<vmem>>, vector<1x512xf32>
    %33 = arith.truncf %30 : vector<1x128xf32> to vector<1x128xbf16>
    %cst_15 = arith.constant dense<0.000000e+00> : vector<1x512xf32>
    %34 = tpu.matmul %33, %7, %cst_15 {dimension_numbers = #tpu.dot_dimension_numbers<[1], [0], [0], [1], [0, 0, 1, 1], [], []>} : vector<1x128xbf16>, vector<128x512xbf16>, vector<1x512xf32> -> vector<1x512xf32>
    %35 = arith.addf %32, %34 : vector<1x512xf32>
    %36 = vector.extract_strided_slice %35 {offsets = [0, 0], sizes = [1, 384], strides = [1, 1]} : vector<1x512xf32> to vector<1x384xf32>
    %37 = arith.negf %36 : vector<1x384xf32>
    %38 = math.exp %37 : vector<1x384xf32>
    %cst_16 = arith.constant 1.000000e+00 : f32
    %39 = vector.broadcast %cst_16 : f32 to vector<1x384xf32>
    %40 = arith.addf %39, %38 : vector<1x384xf32>
    %41 = arith.divf %39, %40 : vector<1x384xf32>
    %42 = vector.extract_strided_slice %41 {offsets = [0, 0], sizes = [1, 128], strides = [1, 1]} : vector<1x384xf32> to vector<1x128xf32>
    %43 = vector.extract_strided_slice %41 {offsets = [0, 128], sizes = [1, 128], strides = [1, 1]} : vector<1x384xf32> to vector<1x128xf32>
    %44 = vector.extract_strided_slice %41 {offsets = [0, 256], sizes = [1, 128], strides = [1, 1]} : vector<1x384xf32> to vector<1x128xf32>
    %45 = vector.extract_strided_slice %35 {offsets = [0, 384], sizes = [1, 128], strides = [1, 1]} : vector<1x512xf32> to vector<1x128xf32>
    %46 = math.tanh %45 : vector<1x128xf32>
    %47 = arith.mulf %43, %28 : vector<1x128xf32>
    %48 = arith.mulf %42, %46 : vector<1x128xf32>
    %49 = arith.addf %47, %48 : vector<1x128xf32>
    %50 = math.tanh %49 : vector<1x128xf32>
    %51 = arith.mulf %44, %50 : vector<1x128xf32>
    %c2_i32 = arith.constant 2 : i32
    %52 = arith.index_cast %c2_i32 : i32 to index
    %c0_17 = arith.constant 0 : index
    %53 = vector.load %arg7[%52, %c0_17] : memref<8x512xf32, #tpu.memory_space<vmem>>, vector<1x512xf32>
    %54 = arith.truncf %51 : vector<1x128xf32> to vector<1x128xbf16>
    %cst_18 = arith.constant dense<0.000000e+00> : vector<1x512xf32>
    %55 = tpu.matmul %54, %7, %cst_18 {dimension_numbers = #tpu.dot_dimension_numbers<[1], [0], [0], [1], [0, 0, 1, 1], [], []>} : vector<1x128xbf16>, vector<128x512xbf16>, vector<1x512xf32> -> vector<1x512xf32>
    %56 = arith.addf %53, %55 : vector<1x512xf32>
    %57 = vector.extract_strided_slice %56 {offsets = [0, 0], sizes = [1, 384], strides = [1, 1]} : vector<1x512xf32> to vector<1x384xf32>
    %58 = arith.negf %57 : vector<1x384xf32>
    %59 = math.exp %58 : vector<1x384xf32>
    %cst_19 = arith.constant 1.000000e+00 : f32
    %60 = vector.broadcast %cst_19 : f32 to vector<1x384xf32>
    %61 = arith.addf %60, %59 : vector<1x384xf32>
    %62 = arith.divf %60, %61 : vector<1x384xf32>
    %63 = vector.extract_strided_slice %62 {offsets = [0, 0], sizes = [1, 128], strides = [1, 1]} : vector<1x384xf32> to vector<1x128xf32>
    %64 = vector.extract_strided_slice %62 {offsets = [0, 128], sizes = [1, 128], strides = [1, 1]} : vector<1x384xf32> to vector<1x128xf32>
    %65 = vector.extract_strided_slice %62 {offsets = [0, 256], sizes = [1, 128], strides = [1, 1]} : vector<1x384xf32> to vector<1x128xf32>
    %66 = vector.extract_strided_slice %56 {offsets = [0, 384], sizes = [1, 128], strides = [1, 1]} : vector<1x512xf32> to vector<1x128xf32>
    %67 = math.tanh %66 : vector<1x128xf32>
    %68 = arith.mulf %64, %49 : vector<1x128xf32>
    %69 = arith.mulf %63, %67 : vector<1x128xf32>
    %70 = arith.addf %68, %69 : vector<1x128xf32>
    %71 = math.tanh %70 : vector<1x128xf32>
    %72 = arith.mulf %65, %71 : vector<1x128xf32>
    %c3_i32 = arith.constant 3 : i32
    %73 = arith.index_cast %c3_i32 : i32 to index
    %c0_20 = arith.constant 0 : index
    %74 = vector.load %arg7[%73, %c0_20] : memref<8x512xf32, #tpu.memory_space<vmem>>, vector<1x512xf32>
    %75 = arith.truncf %72 : vector<1x128xf32> to vector<1x128xbf16>
    %cst_21 = arith.constant dense<0.000000e+00> : vector<1x512xf32>
    %76 = tpu.matmul %75, %7, %cst_21 {dimension_numbers = #tpu.dot_dimension_numbers<[1], [0], [0], [1], [0, 0, 1, 1], [], []>} : vector<1x128xbf16>, vector<128x512xbf16>, vector<1x512xf32> -> vector<1x512xf32>
    %77 = arith.addf %74, %76 : vector<1x512xf32>
    %78 = vector.extract_strided_slice %77 {offsets = [0, 0], sizes = [1, 384], strides = [1, 1]} : vector<1x512xf32> to vector<1x384xf32>
    %79 = arith.negf %78 : vector<1x384xf32>
    %80 = math.exp %79 : vector<1x384xf32>
    %cst_22 = arith.constant 1.000000e+00 : f32
    %81 = vector.broadcast %cst_22 : f32 to vector<1x384xf32>
    %82 = arith.addf %81, %80 : vector<1x384xf32>
    %83 = arith.divf %81, %82 : vector<1x384xf32>
    %84 = vector.extract_strided_slice %83 {offsets = [0, 0], sizes = [1, 128], strides = [1, 1]} : vector<1x384xf32> to vector<1x128xf32>
    %85 = vector.extract_strided_slice %83 {offsets = [0, 128], sizes = [1, 128], strides = [1, 1]} : vector<1x384xf32> to vector<1x128xf32>
    %86 = vector.extract_strided_slice %83 {offsets = [0, 256], sizes = [1, 128], strides = [1, 1]} : vector<1x384xf32> to vector<1x128xf32>
    %87 = vector.extract_strided_slice %77 {offsets = [0, 384], sizes = [1, 128], strides = [1, 1]} : vector<1x512xf32> to vector<1x128xf32>
    %88 = math.tanh %87 : vector<1x128xf32>
    %89 = arith.mulf %85, %70 : vector<1x128xf32>
    %90 = arith.mulf %84, %88 : vector<1x128xf32>
    %91 = arith.addf %89, %90 : vector<1x128xf32>
    %92 = math.tanh %91 : vector<1x128xf32>
    %93 = arith.mulf %86, %92 : vector<1x128xf32>
    %c4_i32 = arith.constant 4 : i32
    %94 = arith.index_cast %c4_i32 : i32 to index
    %c0_23 = arith.constant 0 : index
    %95 = vector.load %arg7[%94, %c0_23] : memref<8x512xf32, #tpu.memory_space<vmem>>, vector<1x512xf32>
    %96 = arith.truncf %93 : vector<1x128xf32> to vector<1x128xbf16>
    %cst_24 = arith.constant dense<0.000000e+00> : vector<1x512xf32>
    %97 = tpu.matmul %96, %7, %cst_24 {dimension_numbers = #tpu.dot_dimension_numbers<[1], [0], [0], [1], [0, 0, 1, 1], [], []>} : vector<1x128xbf16>, vector<128x512xbf16>, vector<1x512xf32> -> vector<1x512xf32>
    %98 = arith.addf %95, %97 : vector<1x512xf32>
    %99 = vector.extract_strided_slice %98 {offsets = [0, 0], sizes = [1, 384], strides = [1, 1]} : vector<1x512xf32> to vector<1x384xf32>
    %100 = arith.negf %99 : vector<1x384xf32>
    %101 = math.exp %100 : vector<1x384xf32>
    %cst_25 = arith.constant 1.000000e+00 : f32
    %102 = vector.broadcast %cst_25 : f32 to vector<1x384xf32>
    %103 = arith.addf %102, %101 : vector<1x384xf32>
    %104 = arith.divf %102, %103 : vector<1x384xf32>
    %105 = vector.extract_strided_slice %104 {offsets = [0, 0], sizes = [1, 128], strides = [1, 1]} : vector<1x384xf32> to vector<1x128xf32>
    %106 = vector.extract_strided_slice %104 {offsets = [0, 128], sizes = [1, 128], strides = [1, 1]} : vector<1x384xf32> to vector<1x128xf32>
    %107 = vector.extract_strided_slice %104 {offsets = [0, 256], sizes = [1, 128], strides = [1, 1]} : vector<1x384xf32> to vector<1x128xf32>
    %108 = vector.extract_strided_slice %98 {offsets = [0, 384], sizes = [1, 128], strides = [1, 1]} : vector<1x512xf32> to vector<1x128xf32>
    %109 = math.tanh %108 : vector<1x128xf32>
    %110 = arith.mulf %106, %91 : vector<1x128xf32>
    %111 = arith.mulf %105, %109 : vector<1x128xf32>
    %112 = arith.addf %110, %111 : vector<1x128xf32>
    %113 = math.tanh %112 : vector<1x128xf32>
    %114 = arith.mulf %107, %113 : vector<1x128xf32>
    %c5_i32 = arith.constant 5 : i32
    %115 = arith.index_cast %c5_i32 : i32 to index
    %c0_26 = arith.constant 0 : index
    %116 = vector.load %arg7[%115, %c0_26] : memref<8x512xf32, #tpu.memory_space<vmem>>, vector<1x512xf32>
    %117 = arith.truncf %114 : vector<1x128xf32> to vector<1x128xbf16>
    %cst_27 = arith.constant dense<0.000000e+00> : vector<1x512xf32>
    %118 = tpu.matmul %117, %7, %cst_27 {dimension_numbers = #tpu.dot_dimension_numbers<[1], [0], [0], [1], [0, 0, 1, 1], [], []>} : vector<1x128xbf16>, vector<128x512xbf16>, vector<1x512xf32> -> vector<1x512xf32>
    %119 = arith.addf %116, %118 : vector<1x512xf32>
    %120 = vector.extract_strided_slice %119 {offsets = [0, 0], sizes = [1, 384], strides = [1, 1]} : vector<1x512xf32> to vector<1x384xf32>
    %121 = arith.negf %120 : vector<1x384xf32>
    %122 = math.exp %121 : vector<1x384xf32>
    %cst_28 = arith.constant 1.000000e+00 : f32
    %123 = vector.broadcast %cst_28 : f32 to vector<1x384xf32>
    %124 = arith.addf %123, %122 : vector<1x384xf32>
    %125 = arith.divf %123, %124 : vector<1x384xf32>
    %126 = vector.extract_strided_slice %125 {offsets = [0, 0], sizes = [1, 128], strides = [1, 1]} : vector<1x384xf32> to vector<1x128xf32>
    %127 = vector.extract_strided_slice %125 {offsets = [0, 128], sizes = [1, 128], strides = [1, 1]} : vector<1x384xf32> to vector<1x128xf32>
    %128 = vector.extract_strided_slice %125 {offsets = [0, 256], sizes = [1, 128], strides = [1, 1]} : vector<1x384xf32> to vector<1x128xf32>
    %129 = vector.extract_strided_slice %119 {offsets = [0, 384], sizes = [1, 128], strides = [1, 1]} : vector<1x512xf32> to vector<1x128xf32>
    %130 = math.tanh %129 : vector<1x128xf32>
    %131 = arith.mulf %127, %112 : vector<1x128xf32>
    %132 = arith.mulf %126, %130 : vector<1x128xf32>
    %133 = arith.addf %131, %132 : vector<1x128xf32>
    %134 = math.tanh %133 : vector<1x128xf32>
    %135 = arith.mulf %128, %134 : vector<1x128xf32>
    %c6_i32 = arith.constant 6 : i32
    %136 = arith.index_cast %c6_i32 : i32 to index
    %c0_29 = arith.constant 0 : index
    %137 = vector.load %arg7[%136, %c0_29] : memref<8x512xf32, #tpu.memory_space<vmem>>, vector<1x512xf32>
    %138 = arith.truncf %135 : vector<1x128xf32> to vector<1x128xbf16>
    %cst_30 = arith.constant dense<0.000000e+00> : vector<1x512xf32>
    %139 = tpu.matmul %138, %7, %cst_30 {dimension_numbers = #tpu.dot_dimension_numbers<[1], [0], [0], [1], [0, 0, 1, 1], [], []>} : vector<1x128xbf16>, vector<128x512xbf16>, vector<1x512xf32> -> vector<1x512xf32>
    %140 = arith.addf %137, %139 : vector<1x512xf32>
    %141 = vector.extract_strided_slice %140 {offsets = [0, 0], sizes = [1, 384], strides = [1, 1]} : vector<1x512xf32> to vector<1x384xf32>
    %142 = arith.negf %141 : vector<1x384xf32>
    %143 = math.exp %142 : vector<1x384xf32>
    %cst_31 = arith.constant 1.000000e+00 : f32
    %144 = vector.broadcast %cst_31 : f32 to vector<1x384xf32>
    %145 = arith.addf %144, %143 : vector<1x384xf32>
    %146 = arith.divf %144, %145 : vector<1x384xf32>
    %147 = vector.extract_strided_slice %146 {offsets = [0, 0], sizes = [1, 128], strides = [1, 1]} : vector<1x384xf32> to vector<1x128xf32>
    %148 = vector.extract_strided_slice %146 {offsets = [0, 128], sizes = [1, 128], strides = [1, 1]} : vector<1x384xf32> to vector<1x128xf32>
    %149 = vector.extract_strided_slice %146 {offsets = [0, 256], sizes = [1, 128], strides = [1, 1]} : vector<1x384xf32> to vector<1x128xf32>
    %150 = vector.extract_strided_slice %140 {offsets = [0, 384], sizes = [1, 128], strides = [1, 1]} : vector<1x512xf32> to vector<1x128xf32>
    %151 = math.tanh %150 : vector<1x128xf32>
    %152 = arith.mulf %148, %133 : vector<1x128xf32>
    %153 = arith.mulf %147, %151 : vector<1x128xf32>
    %154 = arith.addf %152, %153 : vector<1x128xf32>
    %155 = math.tanh %154 : vector<1x128xf32>
    %156 = arith.mulf %149, %155 : vector<1x128xf32>
    %c7_i32 = arith.constant 7 : i32
    %157 = arith.index_cast %c7_i32 : i32 to index
    %c0_32 = arith.constant 0 : index
    %158 = vector.load %arg7[%157, %c0_32] : memref<8x512xf32, #tpu.memory_space<vmem>>, vector<1x512xf32>
    %159 = arith.truncf %156 : vector<1x128xf32> to vector<1x128xbf16>
    %cst_33 = arith.constant dense<0.000000e+00> : vector<1x512xf32>
    %160 = tpu.matmul %159, %7, %cst_33 {dimension_numbers = #tpu.dot_dimension_numbers<[1], [0], [0], [1], [0, 0, 1, 1], [], []>} : vector<1x128xbf16>, vector<128x512xbf16>, vector<1x512xf32> -> vector<1x512xf32>
    %161 = arith.addf %158, %160 : vector<1x512xf32>
    %162 = vector.extract_strided_slice %161 {offsets = [0, 0], sizes = [1, 384], strides = [1, 1]} : vector<1x512xf32> to vector<1x384xf32>
    %163 = arith.negf %162 : vector<1x384xf32>
    %164 = math.exp %163 : vector<1x384xf32>
    %cst_34 = arith.constant 1.000000e+00 : f32
    %165 = vector.broadcast %cst_34 : f32 to vector<1x384xf32>
    %166 = arith.addf %165, %164 : vector<1x384xf32>
    %167 = arith.divf %165, %166 : vector<1x384xf32>
    %168 = vector.extract_strided_slice %167 {offsets = [0, 0], sizes = [1, 128], strides = [1, 1]} : vector<1x384xf32> to vector<1x128xf32>
    %169 = vector.extract_strided_slice %167 {offsets = [0, 128], sizes = [1, 128], strides = [1, 1]} : vector<1x384xf32> to vector<1x128xf32>
    %170 = vector.extract_strided_slice %167 {offsets = [0, 256], sizes = [1, 128], strides = [1, 1]} : vector<1x384xf32> to vector<1x128xf32>
    %171 = vector.extract_strided_slice %161 {offsets = [0, 384], sizes = [1, 128], strides = [1, 1]} : vector<1x512xf32> to vector<1x128xf32>
    %172 = math.tanh %171 : vector<1x128xf32>
    %173 = arith.mulf %169, %154 : vector<1x128xf32>
    %174 = arith.mulf %168, %172 : vector<1x128xf32>
    %175 = arith.addf %173, %174 : vector<1x128xf32>
    %176 = math.tanh %175 : vector<1x128xf32>
    %177 = arith.mulf %170, %176 : vector<1x128xf32>
    %c8_i32 = arith.constant 8 : i32
    %c0_35 = arith.constant 0 : index
    %c0_36 = arith.constant 0 : index
    %178 = vector.load %arg4[%c0_35, %c0_36] : memref<128x128xf32, #tpu.memory_space<vmem>>, vector<128x128xf32>
    %cst_37 = arith.constant dense<0.000000e+00> : vector<1x128xf32>
    %179 = tpu.matmul %177, %178, %cst_37 {dimension_numbers = #tpu.dot_dimension_numbers<[1], [0], [0], [1], [0, 0, 1, 1], [], []>} : vector<1x128xf32>, vector<128x128xf32>, vector<1x128xf32> -> vector<1x128xf32>
    %c0_38 = arith.constant 0 : index
    %c0_39 = arith.constant 0 : index
    %180 = vector.load %arg5[%c0_38, %c0_39] : memref<1x128xf32, #tpu.memory_space<vmem>>, vector<1x128xf32>
    %181 = arith.addf %179, %180 : vector<1x128xf32>
    %c0_40 = arith.constant 0 : index
    %c0_41 = arith.constant 0 : index
    %182 = vector.load %arg6[%c0_40, %c0_41] : memref<1x128xf32, #tpu.memory_space<vmem>>, vector<1x128xf32>
    tpu.vector_store %arg6[%c0_40, %c0_41], %181 {strides = array<i32>} : memref<1x128xf32, #tpu.memory_space<vmem>>, vector<1x128xf32>,
    return
  }
}

</mosaic_0001>

<llo_original>
// kernel: tpu_custom_call.1
$region0: #{tpu_custom_call.1}
  #allocation0 [shape = 'u32[]', space=smem, size = 0x4, offset = 0x4, fixed_abs, tag = 'smem constant byte address 0x4 - core index']
  #allocation1 [shape = 'u32[144,128]{1,0:T(1,128)}', space=vmem, size = 0x12000, scoped, tag = 'internal scratch']
  #allocation2 [shape = 'f32[8,512]{1,0:T(8,128)}', space=vmem, size = 0x4000, scoped, tag = 'scratch operand']
  %s0 = inlined_call_operand.vmem [shape: f32[8,1], index: 0, kind: input, shape index: {}]
  %s1 = inlined_call_operand.vmem [shape: f32[1,512], index: 1, kind: input, shape index: {}]
  %s2 = inlined_call_operand.hbm [shape: bf16[128,512], index: 2, kind: input, shape index: {}]
  %s3 = inlined_call_operand.vmem [shape: f32[1,512], index: 3, kind: input, shape index: {}]
  %s4 = inlined_call_operand.hbm [shape: f32[128,128], index: 4, kind: input, shape index: {}]
  %s5 = inlined_call_operand.vmem [shape: f32[1,128], index: 5, kind: input, shape index: {}]
  %s6 = inlined_call_operand.hbm [shape: f32[1,128], index: 6, kind: output, shape index: {}]
  %s7 = sld [smem:[#allocation0]]
  $region42: #{tpu_custom_call.1} parent=0
    _
  %s9 = ssub.s32 1, %s7
  %s10 = scalar_select 0, %s9, %s7
  $region1: #{tpu_custom_call.1} parent=0
    #allocation3 [shape = 'u8[131072]{0}', space=vmem, size = 0x20000, scoped, tag = 'input window, operand 2, single buffered']
    #allocation4 [shape = 's32[1]{0}', space=sflag, size = 0x4, scoped, tag = 'scoped memory for tpu_custom_call.1']
    #allocation5 [shape = 's32[1]{0}', space=sflag, size = 0x4, scoped, tag = 'scoped memory for tpu_custom_call.1']
    #allocation6 [shape = 'u8[65536]{0}', space=vmem, size = 0x10000, scoped, tag = 'input window, operand 4, single buffered']
    #allocation7 [shape = 's32[1]{0}', space=sflag, size = 0x4, scoped, tag = 'scoped memory for tpu_custom_call.1']
    #allocation8 [shape = 'u8[512]{0}', space=vmem, size = 0x400, scoped, tag = 'output window, operand 0, single buffered']
    %11 = vsyncpa [#allocation4], 0
    %12 = vsyncpa [#allocation7], 0
    %13 = vsyncpa [#allocation5], 0
    // Predicated region
    $region2: #{tpu_custom_call.1} parent=1 // pred_check
      _
    $region3: #{tpu_custom_call.1} parent=1 // pred_check_branch
      %15 = sbr.rel (0) target = $region5
    $region4: #{tpu_custom_call.1} parent=1 // pred_region
      _
    $region5: #{tpu_custom_call.1} parent=1 // pred_fallthru
      _
    // Predicated region
    $region6: #{tpu_custom_call.1} parent=1 // pred_check
      _
    $region7: #{tpu_custom_call.1} parent=1 // pred_check_branch
      %17 = sbr.rel (0) target = $region9
    $region8: #{tpu_custom_call.1} parent=1 // pred_region
      _
    $region9: #{tpu_custom_call.1} parent=1 // pred_fallthru
      _
    // Predicated region
    $region10: #{tpu_custom_call.1} parent=1 // pred_check
      _
    $region11: #{tpu_custom_call.1} parent=1 // pred_check_branch
      %19 = sbr.rel (0) target = $region13
    $region12: #{tpu_custom_call.1} parent=1 // pred_region
      %s21 = ssub.s32 4096, 4096
      %22 = vsyncadd [#allocation4], %s21
      %s23 = sshll.u32 [#allocation3], 4
      %s24 = int_to_ptr.vmem [resolvable:$true] %s23
      %29 = dma.hbm_to_vmem [thread:$0]  %s2, 4096, %s24, [#allocation4], 256, 256, 16
    $region13: #{tpu_custom_call.1} parent=1 // pred_fallthru
      _
    // Predicated region
    $region14: #{tpu_custom_call.1} parent=1 // pred_check
      _
    $region15: #{tpu_custom_call.1} parent=1 // pred_check_branch
      %31 = sbr.rel (0) target = $region17
    $region16: #{tpu_custom_call.1} parent=1 // pred_region
      _
    $region17: #{tpu_custom_call.1} parent=1 // pred_fallthru
      _
    // Predicated region
    $region18: #{tpu_custom_call.1} parent=1 // pred_check
      _
    $region19: #{tpu_custom_call.1} parent=1 // pred_check_branch
      %33 = sbr.rel (0) target = $region21
    $region20: #{tpu_custom_call.1} parent=1 // pred_region
      %s35 = ssub.s32 2048, 2048
      %36 = vsyncadd [#allocation7], %s35
      %s37 = sshll.u32 [#allocation6], 4
      %s38 = int_to_ptr.vmem [resolvable:$true] %s37
      %43 = dma.hbm_to_vmem [thread:$0]  %s4, 2048, %s38, [#allocation7], 128, 128, 8
    $region21: #{tpu_custom_call.1} parent=1 // pred_fallthru
      _
    // Predicated region
    $region22: #{tpu_custom_call.1} parent=1 // pred_check
      _
    $region23: #{tpu_custom_call.1} parent=1 // pred_check_branch
      %45 = sbr.rel (0) target = $region25
    $region24: #{tpu_custom_call.1} parent=1 // pred_region
      _
    $region25: #{tpu_custom_call.1} parent=1 // pred_fallthru
      _
    // Predicated region
    $region26: #{tpu_custom_call.1} parent=1 // pred_check
      _
    $region27: #{tpu_custom_call.1} parent=1 // pred_check_branch
      %47 = sbr.rel (0) target = $region29
    $region28: #{tpu_custom_call.1} parent=1 // pred_region
      %48 = dma.done [#allocation4], 4096
    $region29: #{tpu_custom_call.1} parent=1 // pred_fallthru
      _
    // Predicated region
    $region30: #{tpu_custom_call.1} parent=1 // pred_check
      _
    $region31: #{tpu_custom_call.1} parent=1 // pred_check_branch
      %50 = sbr.rel (0) target = $region33
    $region32: #{tpu_custom_call.1} parent=1 // pred_region
      %51 = dma.done [#allocation7], 2048
    $region33: #{tpu_custom_call.1} parent=1 // pred_fallthru
      _
    %v53 = vld [vmem:[%s0] sm:$0xff]
    %v54 = vld [vmem:[%s1] sm:$0xf]
    %v55 = vld [vmem:[%s3] sm:$0xf]
    %v57 = vlaneseq
    %v58 = vshrl.u32 %v57, 7
    %v59 = vsub.s32 0, %v58
    %v60 = vrot.slane %v55, %v59
    %v61 = vlaneseq
    %v62 = vshrl.u32 %v61, 7
    %v63 = vsub.s32 1, %v62
    %v64 = vrot.slane %v55, %v63
    %v65 = vlaneseq
    %v66 = vshrl.u32 %v65, 7
    %v67 = vsub.s32 2, %v66
    %v68 = vrot.slane %v55, %v67
    %v69 = vlaneseq
    %v70 = vshrl.u32 %v69, 7
    %v71 = vsub.s32 3, %v70
    %v72 = vrot.slane %v55, %v71
    %v78 = vlaneseq
    %v79 = vshrl.u32 %v78, 7
    %v80 = vsub.s32 0, %v79
    %v81 = vrot.slane %v54, %v80
    %v82 = vlaneseq
    %v83 = vshrl.u32 %v82, 7
    %v84 = vsub.s32 1, %v83
    %v85 = vrot.slane %v54, %v84
    %v86 = vlaneseq
    %v87 = vshrl.u32 %v86, 7
    %v88 = vsub.s32 2, %v87
    %v89 = vrot.slane %v54, %v88
    %v90 = vlaneseq
    %v91 = vshrl.u32 %v90, 7
    %v92 = vsub.s32 3, %v91
    %v93 = vrot.slane %v54, %v92
    %vm94 = vcmask 7168
    %v96 = vsel %vm94, %v53, 0
    %vm98 = vcmask 1040384
    %v99 = vsel %vm98, %v81, 0
    %v101 = vsel %vm98, %v85, 0
    %v103 = vsel %vm98, %v89, 0
    %v105 = vsel %vm98, %v93, 0
    %107 = vmatprep.subr.mxu0 %v101
    %108 = vmatpush1.msra.mxu0 %v99
    %109 = vmatprep.subr.mxu0 0.0
    %110 = vmatpush1.msra.mxu0 0.0
    %111 = vmatprep.subr.mxu0 0.0
    %112 = vmatpush1.msra.mxu0 0.0
    %113 = vmatprep.subr.mxu0 0.0
    %114 = vmatpush1.msra.mxu0 0.0
    %115 = vmatprep.subr.mxu0 0.0
    %116 = vmatpush1.msra.mxu0 0.0
    %117 = vmatprep.subr.mxu0 0.0
    %118 = vmatpush1.msra.mxu0 0.0
    %119 = vmatprep.subr.mxu0 0.0
    %120 = vmatpush1.msra.mxu0 0.0
    %121 = vmatprep.subr.mxu0 0.0
    %122 = vmatpush1.msra.mxu0 0.0
    %123 = vmatprep.subr.mxu0 0.0
    %124 = vmatpush1.msra.mxu0 0.0
    %125 = vmatprep.subr.mxu0 0.0
    %126 = vmatpush1.msra.mxu0 0.0
    %127 = vmatprep.subr.mxu0 0.0
    %128 = vmatpush1.msra.mxu0 0.0
    %129 = vmatprep.subr.mxu0 0.0
    %130 = vmatpush1.msra.mxu0 0.0
    %131 = vmatprep.subr.mxu0 0.0
    %132 = vmatpush1.msra.mxu0 0.0
    %133 = vmatprep.subr.mxu0 0.0
    %134 = vmatpush1.msra.mxu0 0.0
    %135 = vmatprep.subr.mxu0 0.0
    %136 = vmatpush1.msra.mxu0 0.0
    %137 = vmatprep.subr.mxu0 0.0
    %138 = vmatpush1.msra.mxu0 0.0
    %139 = vmatprep.subr.mxu0 0.0
    %140 = vmatpush1.msra.mxu0 0.0
    %141 = vmatprep.subr.mxu0 0.0
    %142 = vmatpush1.msra.mxu0 0.0
    %143 = vmatprep.subr.mxu0 0.0
    %144 = vmatpush1.msra.mxu0 0.0
    %145 = vmatprep.subr.mxu0 0.0
    %146 = vmatpush1.msra.mxu0 0.0
    %147 = vmatprep.subr.mxu0 0.0
    %148 = vmatpush1.msra.mxu0 0.0
    %149 = vmatprep.subr.mxu0 0.0
    %150 = vmatpush1.msra.mxu0 0.0
    %151 = vmatprep.subr.mxu0 0.0
    %152 = vmatpush1.msra.mxu0 0.0
    %153 = vmatprep.subr.mxu0 0.0
    %154 = vmatpush1.msra.mxu0 0.0
    %155 = vmatprep.subr.mxu0 0.0
    %156 = vmatpush1.msra.mxu0 0.0
    %157 = vmatprep.subr.mxu0 0.0
    %158 = vmatpush1.msra.mxu0 0.0
    %159 = vmatprep.subr.mxu0 0.0
    %160 = vmatpush1.msra.mxu0 0.0
    %161 = vmatprep.subr.mxu0 0.0
    %162 = vmatpush1.msra.mxu0 0.0
    %163 = vmatprep.subr.mxu0 0.0
    %164 = vmatpush1.msra.mxu0 0.0
    %165 = vmatprep.subr.mxu0 0.0
    %166 = vmatpush1.msra.mxu0 0.0
    %167 = vmatprep.subr.mxu0 0.0
    %168 = vmatpush1.msra.mxu0 0.0
    %169 = vmatprep.subr.mxu0 0.0
    %170 = vmatpush1.msra.mxu0 0.0
    %171 = vmatprep.mubr.f32.mxu0 0.0
    %172 = vmatmul.mubr.f32.gmra.mrb[0].mxu0 %v96
    %v173 = vpop.f32.mrb[0].mxu0
    %v174 = vadd.f32 %v60, %v173
    %v175 = vpop.f32.mrb[0].mxu0
    %v176 = vadd.f32 %v64, %v175
    %177 = vdwg.mxu0
    %178 = vmatprep.subr.mxu0 %v105
    %179 = vmatpush1.msra.mxu0 %v103
    %180 = vmatprep.subr.mxu0 0.0
    %181 = vmatpush1.msra.mxu0 0.0
    %182 = vmatprep.subr.mxu0 0.0
    %183 = vmatpush1.msra.mxu0 0.0
    %184 = vmatprep.subr.mxu0 0.0
    %185 = vmatpush1.msra.mxu0 0.0
    %186 = vmatprep.subr.mxu0 0.0
    %187 = vmatpush1.msra.mxu0 0.0
    %188 = vmatprep.subr.mxu0 0.0
    %189 = vmatpush1.msra.mxu0 0.0
    %190 = vmatprep.subr.mxu0 0.0
    %191 = vmatpush1.msra.mxu0 0.0
    %192 = vmatprep.subr.mxu0 0.0
    %193 = vmatpush1.msra.mxu0 0.0
    %194 = vmatprep.subr.mxu0 0.0
    %195 = vmatpush1.msra.mxu0 0.0
    %196 = vmatprep.subr.mxu0 0.0
    %197 = vmatpush1.msra.mxu0 0.0
    %198 = vmatprep.subr.mxu0 0.0
    %199 = vmatpush1.msra.mxu0 0.0
    %200 = vmatprep.subr.mxu0 0.0
    %201 = vmatpush1.msra.mxu0 0.0
    %202 = vmatprep.subr.mxu0 0.0
    %203 = vmatpush1.msra.mxu0 0.0
    %204 = vmatprep.subr.mxu0 0.0
    %205 = vmatpush1.msra.mxu0 0.0
    %206 = vmatprep.subr.mxu0 0.0
    %207 = vmatpush1.msra.mxu0 0.0
    %208 = vmatprep.subr.mxu0 0.0
    %209 = vmatpush1.msra.mxu0 0.0
    %210 = vmatprep.subr.mxu0 0.0
    %211 = vmatpush1.msra.mxu0 0.0
    %212 = vmatprep.subr.mxu0 0.0
    %213 = vmatpush1.msra.mxu0 0.0
    %214 = vmatprep.subr.mxu0 0.0
    %215 = vmatpush1.msra.mxu0 0.0
    %216 = vmatprep.subr.mxu0 0.0
    %217 = vmatpush1.msra.mxu0 0.0
    %218 = vmatprep.subr.mxu0 0.0
    %219 = vmatpush1.msra.mxu0 0.0
    %220 = vmatprep.subr.mxu0 0.0
    %221 = vmatpush1.msra.mxu0 0.0
    %222 = vmatprep.subr.mxu0 0.0
    %223 = vmatpush1.msra.mxu0 0.0
    %224 = vmatprep.subr.mxu0 0.0
    %225 = vmatpush1.msra.mxu0 0.0
    %226 = vmatprep.subr.mxu0 0.0
    %227 = vmatpush1.msra.mxu0 0.0
    %228 = vmatprep.subr.mxu0 0.0
    %229 = vmatpush1.msra.mxu0 0.0
    %230 = vmatprep.subr.mxu0 0.0
    %231 = vmatpush1.msra.mxu0 0.0
    %232 = vmatprep.subr.mxu0 0.0
    %233 = vmatpush1.msra.mxu0 0.0
    %234 = vmatprep.subr.mxu0 0.0
    %235 = vmatpush1.msra.mxu0 0.0
    %236 = vmatprep.subr.mxu0 0.0
    %237 = vmatpush1.msra.mxu0 0.0
    %238 = vmatprep.subr.mxu0 0.0
    %239 = vmatpush1.msra.mxu0 0.0
    %240 = vmatprep.subr.mxu0 0.0
    %241 = vmatpush1.msra.mxu0 0.0
    %242 = vmatprep.mubr.f32.mxu0 0.0
    %243 = vmatmul.mubr.f32.gmra.mrb[0].mxu0 %v96
    %v244 = vpop.f32.mrb[0].mxu0
    %v245 = vadd.f32 %v68, %v244
    %v246 = vpop.f32.mrb[0].mxu0
    %v247 = vadd.f32 %v72, %v246
    %248 = vdwg.mxu0
    %249 = vst [vmem:[#allocation2] sm:$0xff] %v174
    %250 = vst [vmem:[#allocation2 + $0x8] sm:$0xff] %v176
    %251 = vst [vmem:[#allocation2 + $0x10] sm:$0xff] %v245
    %252 = vst [vmem:[#allocation2 + $0x18] sm:$0xff] %v247
    %v253 = vld [vmem:[#allocation3] sm:$0xff]
    %v254 = vld [vmem:[#allocation3 + $0x8] sm:$0xff]
    %v255 = vld [vmem:[#allocation3 + $0x10] sm:$0xff]
    %v256 = vld [vmem:[#allocation3 + $0x18] sm:$0xff]
    %v257 = vld [vmem:[#allocation3 + $0x20] sm:$0xff]
    %v258 = vld [vmem:[#allocation3 + $0x28] sm:$0xff]
    %v259 = vld [vmem:[#allocation3 + $0x30] sm:$0xff]
    %v260 = vld [vmem:[#allocation3 + $0x38] sm:$0xff]
    %v261 = vld [vmem:[#allocation3 + $0x40] sm:$0xff]
    %v262 = vld [vmem:[#allocation3 + $0x48] sm:$0xff]
    %v263 = vld [vmem:[#allocation3 + $0x50] sm:$0xff]
    %v264 = vld [vmem:[#allocation3 + $0x58] sm:$0xff]
    %v265 = vld [vmem:[#allocation3 + $0x60] sm:$0xff]
    %v266 = vld [vmem:[#allocation3 + $0x68] sm:$0xff]
    %v267 = vld [vmem:[#allocation3 + $0x70] sm:$0xff]
    %v268 = vld [vmem:[#allocation3 + $0x78] sm:$0xff]
    %v269 = vld [vmem:[#allocation3 + $0x80] sm:$0xff]
    %v270 = vld [vmem:[#allocation3 + $0x88] sm:$0xff]
    %v271 = vld [vmem:[#allocation3 + $0x90] sm:$0xff]
    %v272 = vld [vmem:[#allocation3 + $0x98] sm:$0xff]
    %v273 = vld [vmem:[#allocation3 + $0xa0] sm:$0xff]
    %v274 = vld [vmem:[#allocation3 + $0xa8] sm:$0xff]
    %v275 = vld [vmem:[#allocation3 + $0xb0] sm:$0xff]
    %v276 = vld [vmem:[#allocation3 + $0xb8] sm:$0xff]
    %v277 = vld [vmem:[#allocation3 + $0xc0] sm:$0xff]
    %v278 = vld [vmem:[#allocation3 + $0xc8] sm:$0xff]
    %v279 = vld [vmem:[#allocation3 + $0xd0] sm:$0xff]
    %v280 = vld [vmem:[#allocation3 + $0xd8] sm:$0xff]
    %v281 = vld [vmem:[#allocation3 + $0xe0] sm:$0xff]
    %v282 = vld [vmem:[#allocation3 + $0xe8] sm:$0xff]
    %v283 = vld [vmem:[#allocation3 + $0xf0] sm:$0xff]
    %v284 = vld [vmem:[#allocation3 + $0xf8] sm:$0xff]
    %v285 = vld [vmem:[#allocation2] ss:$8 sm:$0xf]
    %v318 = vunpack.c.l.b16 %v253
    %v319 = vunpack.c.h.b16 %v253
    %v320 = vunpack.c.l.b16 %v254
    %v321 = vunpack.c.h.b16 %v254
    %v322 = vunpack.c.l.b16 %v255
    %v323 = vunpack.c.h.b16 %v255
    %v324 = vunpack.c.l.b16 %v256
    %v325 = vunpack.c.h.b16 %v256
    %v326 = vunpack.c.l.b16 %v257
    %v327 = vunpack.c.h.b16 %v257
    %v328 = vunpack.c.l.b16 %v258
    %v329 = vunpack.c.h.b16 %v258
    %v330 = vunpack.c.l.b16 %v259
    %v331 = vunpack.c.h.b16 %v259
    %v332 = vunpack.c.l.b16 %v260
    %v333 = vunpack.c.h.b16 %v260
    %v334 = vunpack.c.l.b16 %v261
    %v335 = vunpack.c.h.b16 %v261
    %v336 = vunpack.c.l.b16 %v262
    %v337 = vunpack.c.h.b16 %v262
    %v338 = vunpack.c.l.b16 %v263
    %v339 = vunpack.c.h.b16 %v263
    %v340 = vunpack.c.l.b16 %v264
    %v341 = vunpack.c.h.b16 %v264
    %v342 = vunpack.c.l.b16 %v265
    %v343 = vunpack.c.h.b16 %v265
    %v344 = vunpack.c.l.b16 %v266
    %v345 = vunpack.c.h.b16 %v266
    %v346 = vunpack.c.l.b16 %v267
    %v347 = vunpack.c.h.b16 %v267
    %v348 = vunpack.c.l.b16 %v268
    %v349 = vunpack.c.h.b16 %v268
    %v350 = vunpack.c.l.b16 %v269
    %v351 = vunpack.c.h.b16 %v269
    %v352 = vunpack.c.l.b16 %v270
    %v353 = vunpack.c.h.b16 %v270
    %v354 = vunpack.c.l.b16 %v271
    %v355 = vunpack.c.h.b16 %v271
    %v356 = vunpack.c.l.b16 %v272
    %v357 = vunpack.c.h.b16 %v272
    %v358 = vunpack.c.l.b16 %v273
    %v359 = vunpack.c.h.b16 %v273
    %v360 = vunpack.c.l.b16 %v274
    %v361 = vunpack.c.h.b16 %v274
    %v362 = vunpack.c.l.b16 %v275
    %v363 = vunpack.c.h.b16 %v275
    %v364 = vunpack.c.l.b16 %v276
    %v365 = vunpack.c.h.b16 %v276
    %v366 = vunpack.c.l.b16 %v277
    %v367 = vunpack.c.h.b16 %v277
    %v368 = vunpack.c.l.b16 %v278
    %v369 = vunpack.c.h.b16 %v278
    %v370 = vunpack.c.l.b16 %v279
    %v371 = vunpack.c.h.b16 %v279
    %v372 = vunpack.c.l.b16 %v280
    %v373 = vunpack.c.h.b16 %v280
    %v374 = vunpack.c.l.b16 %v281
    %v375 = vunpack.c.h.b16 %v281
    %v376 = vunpack.c.l.b16 %v282
    %v377 = vunpack.c.h.b16 %v282
    %v378 = vunpack.c.l.b16 %v283
    %v379 = vunpack.c.h.b16 %v283
    %v380 = vunpack.c.l.b16 %v284
    %v381 = vunpack.c.h.b16 %v284
    %v382 = vpack.c.b16 %v322, %v318
    %v383 = vpack.c.b16 %v323, %v319
    %v384 = vpack.c.b16 %v324, %v320
    %v385 = vpack.c.b16 %v325, %v321
    %v386 = vpack.c.b16 %v330, %v326
    %v387 = vpack.c.b16 %v331, %v327
    %v388 = vpack.c.b16 %v332, %v328
    %v389 = vpack.c.b16 %v333, %v329
    %v390 = vpack.c.b16 %v338, %v334
    %v391 = vpack.c.b16 %v339, %v335
    %v392 = vpack.c.b16 %v340, %v336
    %v393 = vpack.c.b16 %v341, %v337
    %v394 = vpack.c.b16 %v346, %v342
    %v395 = vpack.c.b16 %v347, %v343
    %v396 = vpack.c.b16 %v348, %v344
    %v397 = vpack.c.b16 %v349, %v345
    %v398 = vpack.c.b16 %v354, %v350
    %v399 = vpack.c.b16 %v355, %v351
    %v400 = vpack.c.b16 %v356, %v352
    %v401 = vpack.c.b16 %v357, %v353
    %v402 = vpack.c.b16 %v362, %v358
    %v403 = vpack.c.b16 %v363, %v359
    %v404 = vpack.c.b16 %v364, %v360
    %v405 = vpack.c.b16 %v365, %v361
    %v406 = vpack.c.b16 %v370, %v366
    %v407 = vpack.c.b16 %v371, %v367
    %v408 = vpack.c.b16 %v372, %v368
    %v409 = vpack.c.b16 %v373, %v369
    %v410 = vpack.c.b16 %v378, %v374
    %v411 = vpack.c.b16 %v379, %v375
    %v412 = vpack.c.b16 %v380, %v376
    %v413 = vpack.c.b16 %v381, %v377
    %446 = vmatprep.subr.bf16.mxu0 %v383
    %447 = vmatpush1.bf16.msra.mxu0 %v382
    %448 = vmatprep.subr.bf16.mxu0 %v387
    %449 = vmatpush1.bf16.msra.mxu0 %v386
    %450 = vmatprep.subr.bf16.mxu0 %v391
    %451 = vmatpush1.bf16.msra.mxu0 %v390
    %452 = vmatprep.subr.bf16.mxu0 %v395
    %453 = vmatpush1.bf16.msra.mxu0 %v394
    %454 = vmatprep.subr.bf16.mxu0 %v399
    %455 = vmatpush1.bf16.msra.mxu0 %v398
    %456 = vmatprep.subr.bf16.mxu0 %v403
    %457 = vmatpush1.bf16.msra.mxu0 %v402
    %458 = vmatprep.subr.bf16.mxu0 %v407
    %459 = vmatpush1.bf16.msra.mxu0 %v406
    %460 = vmatprep.subr.bf16.mxu0 %v411
    %461 = vmatpush1.bf16.msra.mxu0 %v410
    %462 = vmatprep.subr.bf16.mxu0 0
    %463 = vmatpush1.bf16.msra.mxu0 0
    %464 = vmatprep.subr.bf16.mxu0 0
    %465 = vmatpush1.bf16.msra.mxu0 0
    %466 = vmatprep.subr.bf16.mxu0 0
    %467 = vmatpush1.bf16.msra.mxu0 0
    %468 = vmatprep.subr.bf16.mxu0 0
    %469 = vmatpush1.bf16.msra.mxu0 0
    %470 = vmatprep.subr.bf16.mxu0 0
    %471 = vmatpush1.bf16.msra.mxu0 0
    %472 = vmatprep.subr.bf16.mxu0 0
    %473 = vmatpush1.bf16.msra.mxu0 0
    %474 = vmatprep.subr.bf16.mxu0 0
    %475 = vmatpush1.bf16.msra.mxu0 0
    %476 = vmatprep.subr.bf16.mxu0 0
    %477 = vmatpush1.bf16.msra.mxu0 0
    %478 = vmatprep.mubr.bf16.mxu0 0
    %479 = vmatmul.mubr.bf16.gmra.mrb[0].mxu0 0
    %v480 = vpop.f32.mrb[0].mxu0
    %v481 = vadd.f32 0.0, %v480
    %v482 = vpop.f32.mrb[0].mxu0
    %v483 = vadd.f32 0.0, %v482
    %v484 = vpop.f32.mrb[0].mxu0
    %v485 = vpop.f32.mrb[0].mxu0
    %486 = vdwg.mxu0
    %487 = vmatprep.subr.bf16.mxu0 %v385
    %488 = vmatpush1.bf16.msra.mxu0 %v384
    %489 = vmatprep.subr.bf16.mxu0 %v389
    %490 = vmatpush1.bf16.msra.mxu0 %v388
    %491 = vmatprep.subr.bf16.mxu0 %v393
    %492 = vmatpush1.bf16.msra.mxu0 %v392
    %493 = vmatprep.subr.bf16.mxu0 %v397
    %494 = vmatpush1.bf16.msra.mxu0 %v396
    %495 = vmatprep.subr.bf16.mxu0 %v401
    %496 = vmatpush1.bf16.msra.mxu0 %v400
    %497 = vmatprep.subr.bf16.mxu0 %v405
    %498 = vmatpush1.bf16.msra.mxu0 %v404
    %499 = vmatprep.subr.bf16.mxu0 %v409
    %500 = vmatpush1.bf16.msra.mxu0 %v408
    %501 = vmatprep.subr.bf16.mxu0 %v413
    %502 = vmatpush1.bf16.msra.mxu0 %v412
    %503 = vmatprep.subr.bf16.mxu0 0
    %504 = vmatpush1.bf16.msra.mxu0 0
    %505 = vmatprep.subr.bf16.mxu0 0
    %506 = vmatpush1.bf16.msra.mxu0 0
    %507 = vmatprep.subr.bf16.mxu0 0
    %508 = vmatpush1.bf16.msra.mxu0 0
    %509 = vmatprep.subr.bf16.mxu0 0
    %510 = vmatpush1.bf16.msra.mxu0 0
    %511 = vmatprep.subr.bf16.mxu0 0
    %512 = vmatpush1.bf16.msra.mxu0 0
    %513 = vmatprep.subr.bf16.mxu0 0
    %514 = vmatpush1.bf16.msra.mxu0 0
    %515 = vmatprep.subr.bf16.mxu0 0
    %516 = vmatpush1.bf16.msra.mxu0 0
    %517 = vmatprep.subr.bf16.mxu0 0
    %518 = vmatpush1.bf16.msra.mxu0 0
    %519 = vmatprep.mubr.bf16.mxu0 0
    %520 = vmatmul.mubr.bf16.gmra.mrb[0].mxu0 0
    %v521 = vpop.f32.mrb[0].mxu0
    %v522 = vadd.f32 0.0, %v521
    %v523 = vpop.f32.mrb[0].mxu0
    %v524 = vadd.f32 0.0, %v523
    %v525 = vpop.f32.mrb[0].mxu0
    %v526 = vpop.f32.mrb[0].mxu0
    %527 = vdwg.mxu0
    %v532 = vcombine.low %v481, %v483
    %v533 = vcombine.low %v522, %v524
    %v535 = vunpack.c.l.s4 1966171168
    %v536 = vunpack.c.0.s8 %v535
    %v537 = vlaneseq
    %v538 = vshrl.u32 %v537, 7
    %v539 = vsub.s32 %v536, %v538
    %v540 = vrot.slane %v532, %v539
    %v542 = vunpack.c.l.s4 1966171168
    %v543 = vunpack.c.0.s8 %v542
    %v544 = vlaneseq
    %v545 = vshrl.u32 %v544, 7
    %v546 = vsub.s32 %v543, %v545
    %v547 = vrot.slane %v533, %v546
    %v548 = vcombine.low %v540, %v547
    %v550 = vunpack.c.l.s4 1966171168
    %v551 = vunpack.c.0.s8 %v550
    %v552 = vlaneseq
    %v553 = vshrl.u32 %v552, 7
    %v554 = vsub.s32 %v551, %v553
    %v555 = vrot.slane %v548, %v554
    %v557 = vadd.f32 %v285, %v555
    %v558 = vxor.u32 %v557, 2147483648
    %v559 = vmul.f32 %v558, 1.442695
    %v560 = vpow.pop %v559
    %v561 = vadd.f32 %v560, 1.0
    %v562 = vrcp.pop %v561
    %v563 = vmul.f32 1.0, %v562
    %v565 = vrot.slane %v557, 3
    %v567 = vtanh.pop %v565
    %v569 = vrot.slane %v563, 1
    %v571 = vmul.f32 %v569, 0.0
    %v572 = vmul.f32 %v563, %v567
    %v573 = vadd.f32 %v571, %v572
    %v574 = vtanh.pop %v573
    %v575 = vrot.slane %v563, 2
    %v577 = vmul.f32 %v575, %v574
    %s578 = scalar_lea.vmem [#allocation2], 1
    %v579 = vld [vmem:[%s578] ss:$8 sm:$0xf]
    %v580 = vpack.c.bf16 %v577, %v577
    %581 = vmatprep.subr.bf16.mxu0 %v383
    %582 = vmatpush1.bf16.msra.mxu0 %v382
    %583 = vmatprep.subr.bf16.mxu0 %v387
    %584 = vmatpush1.bf16.msra.mxu0 %v386
    %585 = vmatprep.subr.bf16.mxu0 %v391
    %586 = vmatpush1.bf16.msra.mxu0 %v390
    %587 = vmatprep.subr.bf16.mxu0 %v395
    %588 = vmatpush1.bf16.msra.mxu0 %v394
    %589 = vmatprep.subr.bf16.mxu0 %v399
    %590 = vmatpush1.bf16.msra.mxu0 %v398
    %591 = vmatprep.subr.bf16.mxu0 %v403
    %592 = vmatpush1.bf16.msra.mxu0 %v402
    %593 = vmatprep.subr.bf16.mxu0 %v407
    %594 = vmatpush1.bf16.msra.mxu0 %v406
    %595 = vmatprep.subr.bf16.mxu0 %v411
    %596 = vmatpush1.bf16.msra.mxu0 %v410
    %597 = vmatprep.subr.bf16.mxu0 0
    %598 = vmatpush1.bf16.msra.mxu0 0
    %599 = vmatprep.subr.bf16.mxu0 0
    %600 = vmatpush1.bf16.msra.mxu0 0
    %601 = vmatprep.subr.bf16.mxu0 0
    %602 = vmatpush1.bf16.msra.mxu0 0
    %603 = vmatprep.subr.bf16.mxu0 0
    %604 = vmatpush1.bf16.msra.mxu0 0
    %605 = vmatprep.subr.bf16.mxu0 0
    %606 = vmatpush1.bf16.msra.mxu0 0
    %607 = vmatprep.subr.bf16.mxu0 0
    %608 = vmatpush1.bf16.msra.mxu0 0
    %609 = vmatprep.subr.bf16.mxu0 0
    %610 = vmatpush1.bf16.msra.mxu0 0
    %611 = vmatprep.subr.bf16.mxu0 0
    %612 = vmatpush1.bf16.msra.mxu0 0
    %613 = vmatprep.mubr.bf16.mxu0 0
    %614 = vmatmul.mubr.bf16.gmra.mrb[0].mxu0 %v580
    %v615 = vpop.f32.mrb[0].mxu0
    %v616 = vadd.f32 0.0, %v615
    %v617 = vpop.f32.mrb[0].mxu0
    %v618 = vadd.f32 0.0, %v617
    %v619 = vpop.f32.mrb[0].mxu0
    %v620 = vpop.f32.mrb[0].mxu0
    %621 = vdwg.mxu0
    %622 = vmatprep.subr.bf16.mxu0 %v385
    %623 = vmatpush1.bf16.msra.mxu0 %v384
    %624 = vmatprep.subr.bf16.mxu0 %v389
    %625 = vmatpush1.bf16.msra.mxu0 %v388
    %626 = vmatprep.subr.bf16.mxu0 %v393
    %627 = vmatpush1.bf16.msra.mxu0 %v392
    %628 = vmatprep.subr.bf16.mxu0 %v397
    %629 = vmatpush1.bf16.msra.mxu0 %v396
    %630 = vmatprep.subr.bf16.mxu0 %v401
    %631 = vmatpush1.bf16.msra.mxu0 %v400
    %632 = vmatprep.subr.bf16.mxu0 %v405
    %633 = vmatpush1.bf16.msra.mxu0 %v404
    %634 = vmatprep.subr.bf16.mxu0 %v409
    %635 = vmatpush1.bf16.msra.mxu0 %v408
    %636 = vmatprep.subr.bf16.mxu0 %v413
    %637 = vmatpush1.bf16.msra.mxu0 %v412
    %638 = vmatprep.subr.bf16.mxu0 0
    %639 = vmatpush1.bf16.msra.mxu0 0
    %640 = vmatprep.subr.bf16.mxu0 0
    %641 = vmatpush1.bf16.msra.mxu0 0
    %642 = vmatprep.subr.bf16.mxu0 0
    %643 = vmatpush1.bf16.msra.mxu0 0
    %644 = vmatprep.subr.bf16.mxu0 0
    %645 = vmatpush1.bf16.msra.mxu0 0
    %646 = vmatprep.subr.bf16.mxu0 0
    %647 = vmatpush1.bf16.msra.mxu0 0
    %648 = vmatprep.subr.bf16.mxu0 0
    %649 = vmatpush1.bf16.msra.mxu0 0
    %650 = vmatprep.subr.bf16.mxu0 0
    %651 = vmatpush1.bf16.msra.mxu0 0
    %652 = vmatprep.subr.bf16.mxu0 0
    %653 = vmatpush1.bf16.msra.mxu0 0
    %654 = vmatprep.mubr.bf16.mxu0 0
    %655 = vmatmul.mubr.bf16.gmra.mrb[0].mxu0 %v580
    %v656 = vpop.f32.mrb[0].mxu0
    %v657 = vadd.f32 0.0, %v656
    %v658 = vpop.f32.mrb[0].mxu0
    %v659 = vadd.f32 0.0, %v658
    %v660 = vpop.f32.mrb[0].mxu0
    %v661 = vpop.f32.mrb[0].mxu0
    %662 = vdwg.mxu0
    %v667 = vcombine.low %v616, %v618
    %v668 = vcombine.low %v657, %v659
    %v670 = vunpack.c.l.s4 1966171168
    %v671 = vunpack.c.0.s8 %v670
    %v672 = vlaneseq
    %v673 = vshrl.u32 %v672, 7
    %v674 = vsub.s32 %v671, %v673
    %v675 = vrot.slane %v667, %v674
    %v677 = vunpack.c.l.s4 1966171168
    %v678 = vunpack.c.0.s8 %v677
    %v679 = vlaneseq
    %v680 = vshrl.u32 %v679, 7
    %v681 = vsub.s32 %v678, %v680
    %v682 = vrot.slane %v668, %v681
    %v683 = vcombine.low %v675, %v682
    %v685 = vunpack.c.l.s4 1966171168
    %v686 = vunpack.c.0.s8 %v685
    %v687 = vlaneseq
    %v688 = vshrl.u32 %v687, 7
    %v689 = vsub.s32 %v686, %v688
    %v690 = vrot.slane %v683, %v689
    %v692 = vadd.f32 %v579, %v690
    %v693 = vxor.u32 %v692, 2147483648
    %v694 = vmul.f32 %v693, 1.442695
    %v695 = vpow.pop %v694
    %v696 = vadd.f32 %v695, 1.0
    %v697 = vrcp.pop %v696
    %v698 = vmul.f32 1.0, %v697
    %v700 = vrot.slane %v692, 3
    %v702 = vtanh.pop %v700
    %v704 = vrot.slane %v698, 1
    %v706 = vmul.f32 %v704, %v573
    %v707 = vmul.f32 %v698, %v702
    %v708 = vadd.f32 %v706, %v707
    %v709 = vtanh.pop %v708
    %v710 = vrot.slane %v698, 2
    %v712 = vmul.f32 %v710, %v709
    %s713 = scalar_lea.vmem [#allocation2], 2
    %v714 = vld [vmem:[%s713] ss:$8 sm:$0xf]
    %v715 = vpack.c.bf16 %v712, %v712
    %716 = vmatprep.subr.bf16.mxu0 %v383
    %717 = vmatpush1.bf16.msra.mxu0 %v382
    %718 = vmatprep.subr.bf16.mxu0 %v387
    %719 = vmatpush1.bf16.msra.mxu0 %v386
    %720 = vmatprep.subr.bf16.mxu0 %v391
    %721 = vmatpush1.bf16.msra.mxu0 %v390
    %722 = vmatprep.subr.bf16.mxu0 %v395
    %723 = vmatpush1.bf16.msra.mxu0 %v394
    %724 = vmatprep.subr.bf16.mxu0 %v399
    %725 = vmatpush1.bf16.msra.mxu0 %v398
    %726 = vmatprep.subr.bf16.mxu0 %v403
    %727 = vmatpush1.bf16.msra.mxu0 %v402
    %728 = vmatprep.subr.bf16.mxu0 %v407
    %729 = vmatpush1.bf16.msra.mxu0 %v406
    %730 = vmatprep.subr.bf16.mxu0 %v411
    %731 = vmatpush1.bf16.msra.mxu0 %v410
    %732 = vmatprep.subr.bf16.mxu0 0
    %733 = vmatpush1.bf16.msra.mxu0 0
    %734 = vmatprep.subr.bf16.mxu0 0
    %735 = vmatpush1.bf16.msra.mxu0 0
    %736 = vmatprep.subr.bf16.mxu0 0
    %737 = vmatpush1.bf16.msra.mxu0 0
    %738 = vmatprep.subr.bf16.mxu0 0
    %739 = vmatpush1.bf16.msra.mxu0 0
    %740 = vmatprep.subr.bf16.mxu0 0
    %741 = vmatpush1.bf16.msra.mxu0 0
    %742 = vmatprep.subr.bf16.mxu0 0
    %743 = vmatpush1.bf16.msra.mxu0 0
    %744 = vmatprep.subr.bf16.mxu0 0
    %745 = vmatpush1.bf16.msra.mxu0 0
    %746 = vmatprep.subr.bf16.mxu0 0
    %747 = vmatpush1.bf16.msra.mxu0 0
    %748 = vmatprep.mubr.bf16.mxu0 0
    %749 = vmatmul.mubr.bf16.gmra.mrb[0].mxu0 %v715
    %v750 = vpop.f32.mrb[0].mxu0
    %v751 = vadd.f32 0.0, %v750
    %v752 = vpop.f32.mrb[0].mxu0
    %v753 = vadd.f32 0.0, %v752
    %v754 = vpop.f32.mrb[0].mxu0
    %v755 = vpop.f32.mrb[0].mxu0
    %756 = vdwg.mxu0
    %757 = vmatprep.subr.bf16.mxu0 %v385
    %758 = vmatpush1.bf16.msra.mxu0 %v384
    %759 = vmatprep.subr.bf16.mxu0 %v389
    %760 = vmatpush1.bf16.msra.mxu0 %v388
    %761 = vmatprep.subr.bf16.mxu0 %v393
    %762 = vmatpush1.bf16.msra.mxu0 %v392
    %763 = vmatprep.subr.bf16.mxu0 %v397
    %764 = vmatpush1.bf16.msra.mxu0 %v396
    %765 = vmatprep.subr.bf16.mxu0 %v401
    %766 = vmatpush1.bf16.msra.mxu0 %v400
    %767 = vmatprep.subr.bf16.mxu0 %v405
    %768 = vmatpush1.bf16.msra.mxu0 %v404
    %769 = vmatprep.subr.bf16.mxu0 %v409
    %770 = vmatpush1.bf16.msra.mxu0 %v408
    %771 = vmatprep.subr.bf16.mxu0 %v413
    %772 = vmatpush1.bf16.msra.mxu0 %v412
    %773 = vmatprep.subr.bf16.mxu0 0
    %774 = vmatpush1.bf16.msra.mxu0 0
    %775 = vmatprep.subr.bf16.mxu0 0
    %776 = vmatpush1.bf16.msra.mxu0 0
    %777 = vmatprep.subr.bf16.mxu0 0
    %778 = vmatpush1.bf16.msra.mxu0 0
    %779 = vmatprep.subr.bf16.mxu0 0
    %780 = vmatpush1.bf16.msra.mxu0 0
    %781 = vmatprep.subr.bf16.mxu0 0
    %782 = vmatpush1.bf16.msra.mxu0 0
    %783 = vmatprep.subr.bf16.mxu0 0
    %784 = vmatpush1.bf16.msra.mxu0 0
    %785 = vmatprep.subr.bf16.mxu0 0
    %786 = vmatpush1.bf16.msra.mxu0 0
    %787 = vmatprep.subr.bf16.mxu0 0
    %788 = vmatpush1.bf16.msra.mxu0 0
    %789 = vmatprep.mubr.bf16.mxu0 0
    %790 = vmatmul.mubr.bf16.gmra.mrb[0].mxu0 %v715
    %v791 = vpop.f32.mrb[0].mxu0
    %v792 = vadd.f32 0.0, %v791
    %v793 = vpop.f32.mrb[0].mxu0
    %v794 = vadd.f32 0.0, %v793
    %v795 = vpop.f32.mrb[0].mxu0
    %v796 = vpop.f32.mrb[0].mxu0
    %797 = vdwg.mxu0
    %v802 = vcombine.low %v751, %v753
    %v803 = vcombine.low %v792, %v794
    %v805 = vunpack.c.l.s4 1966171168
    %v806 = vunpack.c.0.s8 %v805
    %v807 = vlaneseq
    %v808 = vshrl.u32 %v807, 7
    %v809 = vsub.s32 %v806, %v808
    %v810 = vrot.slane %v802, %v809
    %v812 = vunpack.c.l.s4 1966171168
    %v813 = vunpack.c.0.s8 %v812
    %v814 = vlaneseq
    %v815 = vshrl.u32 %v814, 7
    %v816 = vsub.s32 %v813, %v815
    %v817 = vrot.slane %v803, %v816
    %v818 = vcombine.low %v810, %v817
    %v820 = vunpack.c.l.s4 1966171168
    %v821 = vunpack.c.0.s8 %v820
    %v822 = vlaneseq
    %v823 = vshrl.u32 %v822, 7
    %v824 = vsub.s32 %v821, %v823
    %v825 = vrot.slane %v818, %v824
    %v827 = vadd.f32 %v714, %v825
    %v828 = vxor.u32 %v827, 2147483648
    %v829 = vmul.f32 %v828, 1.442695
    %v830 = vpow.pop %v829
    %v831 = vadd.f32 %v830, 1.0
    %v832 = vrcp.pop %v831
    %v833 = vmul.f32 1.0, %v832
    %v835 = vrot.slane %v827, 3
    %v837 = vtanh.pop %v835
    %v839 = vrot.slane %v833, 1
    %v841 = vmul.f32 %v839, %v708
    %v842 = vmul.f32 %v833, %v837
    %v843 = vadd.f32 %v841, %v842
    %v844 = vtanh.pop %v843
    %v845 = vrot.slane %v833, 2
    %v847 = vmul.f32 %v845, %v844
    %s848 = scalar_lea.vmem [#allocation2], 3
    %v849 = vld [vmem:[%s848] ss:$8 sm:$0xf]
    %v850 = vpack.c.bf16 %v847, %v847
    %851 = vmatprep.subr.bf16.mxu0 %v383
    %852 = vmatpush1.bf16.msra.mxu0 %v382
    %853 = vmatprep.subr.bf16.mxu0 %v387
    %854 = vmatpush1.bf16.msra.mxu0 %v386
    %855 = vmatprep.subr.bf16.mxu0 %v391
    %856 = vmatpush1.bf16.msra.mxu0 %v390
    %857 = vmatprep.subr.bf16.mxu0 %v395
    %858 = vmatpush1.bf16.msra.mxu0 %v394
    %859 = vmatprep.subr.bf16.mxu0 %v399
    %860 = vmatpush1.bf16.msra.mxu0 %v398
    %861 = vmatprep.subr.bf16.mxu0 %v403
    %862 = vmatpush1.bf16.msra.mxu0 %v402
    %863 = vmatprep.subr.bf16.mxu0 %v407
    %864 = vmatpush1.bf16.msra.mxu0 %v406
    %865 = vmatprep.subr.bf16.mxu0 %v411
    %866 = vmatpush1.bf16.msra.mxu0 %v410
    %867 = vmatprep.subr.bf16.mxu0 0
    %868 = vmatpush1.bf16.msra.mxu0 0
    %869 = vmatprep.subr.bf16.mxu0 0
    %870 = vmatpush1.bf16.msra.mxu0 0
    %871 = vmatprep.subr.bf16.mxu0 0
    %872 = vmatpush1.bf16.msra.mxu0 0
    %873 = vmatprep.subr.bf16.mxu0 0
    %874 = vmatpush1.bf16.msra.mxu0 0
    %875 = vmatprep.subr.bf16.mxu0 0
    %876 = vmatpush1.bf16.msra.mxu0 0
    %877 = vmatprep.subr.bf16.mxu0 0
    %878 = vmatpush1.bf16.msra.mxu0 0
    %879 = vmatprep.subr.bf16.mxu0 0
    %880 = vmatpush1.bf16.msra.mxu0 0
    %881 = vmatprep.subr.bf16.mxu0 0
    %882 = vmatpush1.bf16.msra.mxu0 0
    %883 = vmatprep.mubr.bf16.mxu0 0
    %884 = vmatmul.mubr.bf16.gmra.mrb[0].mxu0 %v850
    %v885 = vpop.f32.mrb[0].mxu0
    %v886 = vadd.f32 0.0, %v885
    %v887 = vpop.f32.mrb[0].mxu0
    %v888 = vadd.f32 0.0, %v887
    %v889 = vpop.f32.mrb[0].mxu0
    %v890 = vpop.f32.mrb[0].mxu0
    %891 = vdwg.mxu0
    %892 = vmatprep.subr.bf16.mxu0 %v385
    %893 = vmatpush1.bf16.msra.mxu0 %v384
    %894 = vmatprep.subr.bf16.mxu0 %v389
    %895 = vmatpush1.bf16.msra.mxu0 %v388
    %896 = vmatprep.subr.bf16.mxu0 %v393
    %897 = vmatpush1.bf16.msra.mxu0 %v392
    %898 = vmatprep.subr.bf16.mxu0 %v397
    %899 = vmatpush1.bf16.msra.mxu0 %v396
    %900 = vmatprep.subr.bf16.mxu0 %v401
    %901 = vmatpush1.bf16.msra.mxu0 %v400
    %902 = vmatprep.subr.bf16.mxu0 %v405
    %903 = vmatpush1.bf16.msra.mxu0 %v404
    %904 = vmatprep.subr.bf16.mxu0 %v409
    %905 = vmatpush1.bf16.msra.mxu0 %v408
    %906 = vmatprep.subr.bf16.mxu0 %v413
    %907 = vmatpush1.bf16.msra.mxu0 %v412
    %908 = vmatprep.subr.bf16.mxu0 0
    %909 = vmatpush1.bf16.msra.mxu0 0
    %910 = vmatprep.subr.bf16.mxu0 0
    %911 = vmatpush1.bf16.msra.mxu0 0
    %912 = vmatprep.subr.bf16.mxu0 0
    %913 = vmatpush1.bf16.msra.mxu0 0
    %914 = vmatprep.subr.bf16.mxu0 0
    %915 = vmatpush1.bf16.msra.mxu0 0
    %916 = vmatprep.subr.bf16.mxu0 0
    %917 = vmatpush1.bf16.msra.mxu0 0
    %918 = vmatprep.subr.bf16.mxu0 0
    %919 = vmatpush1.bf16.msra.mxu0 0
    %920 = vmatprep.subr.bf16.mxu0 0
    %921 = vmatpush1.bf16.msra.mxu0 0
    %922 = vmatprep.subr.bf16.mxu0 0
    %923 = vmatpush1.bf16.msra.mxu0 0
    %924 = vmatprep.mubr.bf16.mxu0 0
    %925 = vmatmul.mubr.bf16.gmra.mrb[0].mxu0 %v850
    %v926 = vpop.f32.mrb[0].mxu0
    %v927 = vadd.f32 0.0, %v926
    %v928 = vpop.f32.mrb[0].mxu0
    %v929 = vadd.f32 0.0, %v928
    %v930 = vpop.f32.mrb[0].mxu0
    %v931 = vpop.f32.mrb[0].mxu0
    %932 = vdwg.mxu0
    %v937 = vcombine.low %v886, %v888
    %v938 = vcombine.low %v927, %v929
    %v940 = vunpack.c.l.s4 1966171168
    %v941 = vunpack.c.0.s8 %v940
    %v942 = vlaneseq
    %v943 = vshrl.u32 %v942, 7
    %v944 = vsub.s32 %v941, %v943
    %v945 = vrot.slane %v937, %v944
    %v947 = vunpack.c.l.s4 1966171168
    %v948 = vunpack.c.0.s8 %v947
    %v949 = vlaneseq
    %v950 = vshrl.u32 %v949, 7
    %v951 = vsub.s32 %v948, %v950
    %v952 = vrot.slane %v938, %v951
    %v953 = vcombine.low %v945, %v952
    %v955 = vunpack.c.l.s4 1966171168
    %v956 = vunpack.c.0.s8 %v955
    %v957 = vlaneseq
    %v958 = vshrl.u32 %v957, 7
    %v959 = vsub.s32 %v956, %v958
    %v960 = vrot.slane %v953, %v959
    %v962 = vadd.f32 %v849, %v960
    %v963 = vxor.u32 %v962, 2147483648
    %v964 = vmul.f32 %v963, 1.442695
    %v965 = vpow.pop %v964
    %v966 = vadd.f32 %v965, 1.0
    %v967 = vrcp.pop %v966
    %v968 = vmul.f32 1.0, %v967
    %v970 = vrot.slane %v962, 3
    %v972 = vtanh.pop %v970
    %v974 = vrot.slane %v968, 1
    %v976 = vmul.f32 %v974, %v843
    %v977 = vmul.f32 %v968, %v972
    %v978 = vadd.f32 %v976, %v977
    %v979 = vtanh.pop %v978
    %v980 = vrot.slane %v968, 2
    %v982 = vmul.f32 %v980, %v979
    %s983 = scalar_lea.vmem [#allocation2], 4
    %v984 = vld [vmem:[%s983] ss:$8 sm:$0xf]
    %v985 = vpack.c.bf16 %v982, %v982
    %986 = vmatprep.subr.bf16.mxu0 %v383
    %987 = vmatpush1.bf16.msra.mxu0 %v382
    %988 = vmatprep.subr.bf16.mxu0 %v387
    %989 = vmatpush1.bf16.msra.mxu0 %v386
    %990 = vmatprep.subr.bf16.mxu0 %v391
    %991 = vmatpush1.bf16.msra.mxu0 %v390
    %992 = vmatprep.subr.bf16.mxu0 %v395
    %993 = vmatpush1.bf16.msra.mxu0 %v394
    %994 = vmatprep.subr.bf16.mxu0 %v399
    %995 = vmatpush1.bf16.msra.mxu0 %v398
    %996 = vmatprep.subr.bf16.mxu0 %v403
    %997 = vmatpush1.bf16.msra.mxu0 %v402
    %998 = vmatprep.subr.bf16.mxu0 %v407
    %999 = vmatpush1.bf16.msra.mxu0 %v406
    %1000 = vmatprep.subr.bf16.mxu0 %v411
    %1001 = vmatpush1.bf16.msra.mxu0 %v410
    %1002 = vmatprep.subr.bf16.mxu0 0
    %1003 = vmatpush1.bf16.msra.mxu0 0
    %1004 = vmatprep.subr.bf16.mxu0 0
    %1005 = vmatpush1.bf16.msra.mxu0 0
    %1006 = vmatprep.subr.bf16.mxu0 0
    %1007 = vmatpush1.bf16.msra.mxu0 0
    %1008 = vmatprep.subr.bf16.mxu0 0
    %1009 = vmatpush1.bf16.msra.mxu0 0
    %1010 = vmatprep.subr.bf16.mxu0 0
    %1011 = vmatpush1.bf16.msra.mxu0 0
    %1012 = vmatprep.subr.bf16.mxu0 0
    %1013 = vmatpush1.bf16.msra.mxu0 0
    %1014 = vmatprep.subr.bf16.mxu0 0
    %1015 = vmatpush1.bf16.msra.mxu0 0
    %1016 = vmatprep.subr.bf16.mxu0 0
    %1017 = vmatpush1.bf16.msra.mxu0 0
    %1018 = vmatprep.mubr.bf16.mxu0 0
    %1019 = vmatmul.mubr.bf16.gmra.mrb[0].mxu0 %v985
    %v1020 = vpop.f32.mrb[0].mxu0
    %v1021 = vadd.f32 0.0, %v1020
    %v1022 = vpop.f32.mrb[0].mxu0
    %v1023 = vadd.f32 0.0, %v1022
    %v1024 = vpop.f32.mrb[0].mxu0
    %v1025 = vpop.f32.mrb[0].mxu0
    %1026 = vdwg.mxu0
    %1027 = vmatprep.subr.bf16.mxu0 %v385
    %1028 = vmatpush1.bf16.msra.mxu0 %v384
    %1029 = vmatprep.subr.bf16.mxu0 %v389
    %1030 = vmatpush1.bf16.msra.mxu0 %v388
    %1031 = vmatprep.subr.bf16.mxu0 %v393
    %1032 = vmatpush1.bf16.msra.mxu0 %v392
    %1033 = vmatprep.subr.bf16.mxu0 %v397
    %1034 = vmatpush1.bf16.msra.mxu0 %v396
    %1035 = vmatprep.subr.bf16.mxu0 %v401
    %1036 = vmatpush1.bf16.msra.mxu0 %v400
    %1037 = vmatprep.subr.bf16.mxu0 %v405
    %1038 = vmatpush1.bf16.msra.mxu0 %v404
    %1039 = vmatprep.subr.bf16.mxu0 %v409
    %1040 = vmatpush1.bf16.msra.mxu0 %v408
    %1041 = vmatprep.subr.bf16.mxu0 %v413
    %1042 = vmatpush1.bf16.msra.mxu0 %v412
    %1043 = vmatprep.subr.bf16.mxu0 0
    %1044 = vmatpush1.bf16.msra.mxu0 0
    %1045 = vmatprep.subr.bf16.mxu0 0
    %1046 = vmatpush1.bf16.msra.mxu0 0
    %1047 = vmatprep.subr.bf16.mxu0 0
    %1048 = vmatpush1.bf16.msra.mxu0 0
    %1049 = vmatprep.subr.bf16.mxu0 0
    %1050 = vmatpush1.bf16.msra.mxu0 0
    %1051 = vmatprep.subr.bf16.mxu0 0
    %1052 = vmatpush1.bf16.msra.mxu0 0
    %1053 = vmatprep.subr.bf16.mxu0 0
    %1054 = vmatpush1.bf16.msra.mxu0 0
    %1055 = vmatprep.subr.bf16.mxu0 0
    %1056 = vmatpush1.bf16.msra.mxu0 0
    %1057 = vmatprep.subr.bf16.mxu0 0
    %1058 = vmatpush1.bf16.msra.mxu0 0
    %1059 = vmatprep.mubr.bf16.mxu0 0
    %1060 = vmatmul.mubr.bf16.gmra.mrb[0].mxu0 %v985
    %v1061 = vpop.f32.mrb[0].mxu0
    %v1062 = vadd.f32 0.0, %v1061
    %v1063 = vpop.f32.mrb[0].mxu0
    %v1064 = vadd.f32 0.0, %v1063
    %v1065 = vpop.f32.mrb[0].mxu0
    %v1066 = vpop.f32.mrb[0].mxu0
    %1067 = vdwg.mxu0
    %v1072 = vcombine.low %v1021, %v1023
    %v1073 = vcombine.low %v1062, %v1064
    %v1075 = vunpack.c.l.s4 1966171168
    %v1076 = vunpack.c.0.s8 %v1075
    %v1077 = vlaneseq
    %v1078 = vshrl.u32 %v1077, 7
    %v1079 = vsub.s32 %v1076, %v1078
    %v1080 = vrot.slane %v1072, %v1079
    %v1082 = vunpack.c.l.s4 1966171168
    %v1083 = vunpack.c.0.s8 %v1082
    %v1084 = vlaneseq
    %v1085 = vshrl.u32 %v1084, 7
    %v1086 = vsub.s32 %v1083, %v1085
    %v1087 = vrot.slane %v1073, %v1086
    %v1088 = vcombine.low %v1080, %v1087
    %v1090 = vunpack.c.l.s4 1966171168
    %v1091 = vunpack.c.0.s8 %v1090
    %v1092 = vlaneseq
    %v1093 = vshrl.u32 %v1092, 7
    %v1094 = vsub.s32 %v1091, %v1093
    %v1095 = vrot.slane %v1088, %v1094
    %v1097 = vadd.f32 %v984, %v1095
    %v1098 = vxor.u32 %v1097, 2147483648
    %v1099 = vmul.f32 %v1098, 1.442695
    %v1100 = vpow.pop %v1099
    %v1101 = vadd.f32 %v1100, 1.0
    %v1102 = vrcp.pop %v1101
    %v1103 = vmul.f32 1.0, %v1102
    %v1105 = vrot.slane %v1097, 3
    %v1107 = vtanh.pop %v1105
    %v1109 = vrot.slane %v1103, 1
    %v1111 = vmul.f32 %v1109, %v978
    %v1112 = vmul.f32 %v1103, %v1107
    %v1113 = vadd.f32 %v1111, %v1112
    %v1114 = vtanh.pop %v1113
    %v1115 = vrot.slane %v1103, 2
    %v1117 = vmul.f32 %v1115, %v1114
    %s1118 = scalar_lea.vmem [#allocation2], 5
    %v1119 = vld [vmem:[%s1118] ss:$8 sm:$0xf]
    %v1120 = vpack.c.bf16 %v1117, %v1117
    %1121 = vmatprep.subr.bf16.mxu0 %v383
    %1122 = vmatpush1.bf16.msra.mxu0 %v382
    %1123 = vmatprep.subr.bf16.mxu0 %v387
    %1124 = vmatpush1.bf16.msra.mxu0 %v386
    %1125 = vmatprep.subr.bf16.mxu0 %v391
    %1126 = vmatpush1.bf16.msra.mxu0 %v390
    %1127 = vmatprep.subr.bf16.mxu0 %v395
    %1128 = vmatpush1.bf16.msra.mxu0 %v394
    %1129 = vmatprep.subr.bf16.mxu0 %v399
    %1130 = vmatpush1.bf16.msra.mxu0 %v398
    %1131 = vmatprep.subr.bf16.mxu0 %v403
    %1132 = vmatpush1.bf16.msra.mxu0 %v402
    %1133 = vmatprep.subr.bf16.mxu0 %v407
    %1134 = vmatpush1.bf16.msra.mxu0 %v406
    %1135 = vmatprep.subr.bf16.mxu0 %v411
    %1136 = vmatpush1.bf16.msra.mxu0 %v410
    %1137 = vmatprep.subr.bf16.mxu0 0
    %1138 = vmatpush1.bf16.msra.mxu0 0
    %1139 = vmatprep.subr.bf16.mxu0 0
    %1140 = vmatpush1.bf16.msra.mxu0 0
    %1141 = vmatprep.subr.bf16.mxu0 0
    %1142 = vmatpush1.bf16.msra.mxu0 0
    %1143 = vmatprep.subr.bf16.mxu0 0
    %1144 = vmatpush1.bf16.msra.mxu0 0
    %1145 = vmatprep.subr.bf16.mxu0 0
    %1146 = vmatpush1.bf16.msra.mxu0 0
    %1147 = vmatprep.subr.bf16.mxu0 0
    %1148 = vmatpush1.bf16.msra.mxu0 0
    %1149 = vmatprep.subr.bf16.mxu0 0
    %1150 = vmatpush1.bf16.msra.mxu0 0
    %1151 = vmatprep.subr.bf16.mxu0 0
    %1152 = vmatpush1.bf16.msra.mxu0 0
    %1153 = vmatprep.mubr.bf16.mxu0 0
    %1154 = vmatmul.mubr.bf16.gmra.mrb[0].mxu0 %v1120
    %v1155 = vpop.f32.mrb[0].mxu0
    %v1156 = vadd.f32 0.0, %v1155
    %v1157 = vpop.f32.mrb[0].mxu0
    %v1158 = vadd.f32 0.0, %v1157
    %v1159 = vpop.f32.mrb[0].mxu0
    %v1160 = vpop.f32.mrb[0].mxu0
    %1161 = vdwg.mxu0
    %1162 = vmatprep.subr.bf16.mxu0 %v385
    %1163 = vmatpush1.bf16.msra.mxu0 %v384
    %1164 = vmatprep.subr.bf16.mxu0 %v389
    %1165 = vmatpush1.bf16.msra.mxu0 %v388
    %1166 = vmatprep.subr.bf16.mxu0 %v393
    %1167 = vmatpush1.bf16.msra.mxu0 %v392
    %1168 = vmatprep.subr.bf16.mxu0 %v397
    %1169 = vmatpush1.bf16.msra.mxu0 %v396
    %1170 = vmatprep.subr.bf16.mxu0 %v401
    %1171 = vmatpush1.bf16.msra.mxu0 %v400
    %1172 = vmatprep.subr.bf16.mxu0 %v405
    %1173 = vmatpush1.bf16.msra.mxu0 %v404
    %1174 = vmatprep.subr.bf16.mxu0 %v409
    %1175 = vmatpush1.bf16.msra.mxu0 %v408
    %1176 = vmatprep.subr.bf16.mxu0 %v413
    %1177 = vmatpush1.bf16.msra.mxu0 %v412
    %1178 = vmatprep.subr.bf16.mxu0 0
    %1179 = vmatpush1.bf16.msra.mxu0 0
    %1180 = vmatprep.subr.bf16.mxu0 0
    %1181 = vmatpush1.bf16.msra.mxu0 0
    %1182 = vmatprep.subr.bf16.mxu0 0
    %1183 = vmatpush1.bf16.msra.mxu0 0
    %1184 = vmatprep.subr.bf16.mxu0 0
    %1185 = vmatpush1.bf16.msra.mxu0 0
    %1186 = vmatprep.subr.bf16.mxu0 0
    %1187 = vmatpush1.bf16.msra.mxu0 0
    %1188 = vmatprep.subr.bf16.mxu0 0
    %1189 = vmatpush1.bf16.msra.mxu0 0
    %1190 = vmatprep.subr.bf16.mxu0 0
    %1191 = vmatpush1.bf16.msra.mxu0 0
    %1192 = vmatprep.subr.bf16.mxu0 0
    %1193 = vmatpush1.bf16.msra.mxu0 0
    %1194 = vmatprep.mubr.bf16.mxu0 0
    %1195 = vmatmul.mubr.bf16.gmra.mrb[0].mxu0 %v1120
    %v1196 = vpop.f32.mrb[0].mxu0
    %v1197 = vadd.f32 0.0, %v1196
    %v1198 = vpop.f32.mrb[0].mxu0
    %v1199 = vadd.f32 0.0, %v1198
    %v1200 = vpop.f32.mrb[0].mxu0
    %v1201 = vpop.f32.mrb[0].mxu0
    %1202 = vdwg.mxu0
    %v1207 = vcombine.low %v1156, %v1158
    %v1208 = vcombine.low %v1197, %v1199
    %v1210 = vunpack.c.l.s4 1966171168
    %v1211 = vunpack.c.0.s8 %v1210
    %v1212 = vlaneseq
    %v1213 = vshrl.u32 %v1212, 7
    %v1214 = vsub.s32 %v1211, %v1213
    %v1215 = vrot.slane %v1207, %v1214
    %v1217 = vunpack.c.l.s4 1966171168
    %v1218 = vunpack.c.0.s8 %v1217
    %v1219 = vlaneseq
    %v1220 = vshrl.u32 %v1219, 7
    %v1221 = vsub.s32 %v1218, %v1220
    %v1222 = vrot.slane %v1208, %v1221
    %v1223 = vcombine.low %v1215, %v1222
    %v1225 = vunpack.c.l.s4 1966171168
    %v1226 = vunpack.c.0.s8 %v1225
    %v1227 = vlaneseq
    %v1228 = vshrl.u32 %v1227, 7
    %v1229 = vsub.s32 %v1226, %v1228
    %v1230 = vrot.slane %v1223, %v1229
    %v1232 = vadd.f32 %v1119, %v1230
    %v1233 = vxor.u32 %v1232, 2147483648
    %v1234 = vmul.f32 %v1233, 1.442695
    %v1235 = vpow.pop %v1234
    %v1236 = vadd.f32 %v1235, 1.0
    %v1237 = vrcp.pop %v1236
    %v1238 = vmul.f32 1.0, %v1237
    %v1240 = vrot.slane %v1232, 3
    %v1242 = vtanh.pop %v1240
    %v1244 = vrot.slane %v1238, 1
    %v1246 = vmul.f32 %v1244, %v1113
    %v1247 = vmul.f32 %v1238, %v1242
    %v1248 = vadd.f32 %v1246, %v1247
    %v1249 = vtanh.pop %v1248
    %v1250 = vrot.slane %v1238, 2
    %v1252 = vmul.f32 %v1250, %v1249
    %s1253 = scalar_lea.vmem [#allocation2], 6
    %v1254 = vld [vmem:[%s1253] ss:$8 sm:$0xf]
    %v1255 = vpack.c.bf16 %v1252, %v1252
    %1256 = vmatprep.subr.bf16.mxu0 %v383
    %1257 = vmatpush1.bf16.msra.mxu0 %v382
    %1258 = vmatprep.subr.bf16.mxu0 %v387
    %1259 = vmatpush1.bf16.msra.mxu0 %v386
    %1260 = vmatprep.subr.bf16.mxu0 %v391
    %1261 = vmatpush1.bf16.msra.mxu0 %v390
    %1262 = vmatprep.subr.bf16.mxu0 %v395
    %1263 = vmatpush1.bf16.msra.mxu0 %v394
    %1264 = vmatprep.subr.bf16.mxu0 %v399
    %1265 = vmatpush1.bf16.msra.mxu0 %v398
    %1266 = vmatprep.subr.bf16.mxu0 %v403
    %1267 = vmatpush1.bf16.msra.mxu0 %v402
    %1268 = vmatprep.subr.bf16.mxu0 %v407
    %1269 = vmatpush1.bf16.msra.mxu0 %v406
    %1270 = vmatprep.subr.bf16.mxu0 %v411
    %1271 = vmatpush1.bf16.msra.mxu0 %v410
    %1272 = vmatprep.subr.bf16.mxu0 0
    %1273 = vmatpush1.bf16.msra.mxu0 0
    %1274 = vmatprep.subr.bf16.mxu0 0
    %1275 = vmatpush1.bf16.msra.mxu0 0
    %1276 = vmatprep.subr.bf16.mxu0 0
    %1277 = vmatpush1.bf16.msra.mxu0 0
    %1278 = vmatprep.subr.bf16.mxu0 0
    %1279 = vmatpush1.bf16.msra.mxu0 0
    %1280 = vmatprep.subr.bf16.mxu0 0
    %1281 = vmatpush1.bf16.msra.mxu0 0
    %1282 = vmatprep.subr.bf16.mxu0 0
    %1283 = vmatpush1.bf16.msra.mxu0 0
    %1284 = vmatprep.subr.bf16.mxu0 0
    %1285 = vmatpush1.bf16.msra.mxu0 0
    %1286 = vmatprep.subr.bf16.mxu0 0
    %1287 = vmatpush1.bf16.msra.mxu0 0
    %1288 = vmatprep.mubr.bf16.mxu0 0
    %1289 = vmatmul.mubr.bf16.gmra.mrb[0].mxu0 %v1255
    %v1290 = vpop.f32.mrb[0].mxu0
    %v1291 = vadd.f32 0.0, %v1290
    %v1292 = vpop.f32.mrb[0].mxu0
    %v1293 = vadd.f32 0.0, %v1292
    %v1294 = vpop.f32.mrb[0].mxu0
    %v1295 = vpop.f32.mrb[0].mxu0
    %1296 = vdwg.mxu0
    %1297 = vmatprep.subr.bf16.mxu0 %v385
    %1298 = vmatpush1.bf16.msra.mxu0 %v384
    %1299 = vmatprep.subr.bf16.mxu0 %v389
    %1300 = vmatpush1.bf16.msra.mxu0 %v388
    %1301 = vmatprep.subr.bf16.mxu0 %v393
    %1302 = vmatpush1.bf16.msra.mxu0 %v392
    %1303 = vmatprep.subr.bf16.mxu0 %v397
    %1304 = vmatpush1.bf16.msra.mxu0 %v396
    %1305 = vmatprep.subr.bf16.mxu0 %v401
    %1306 = vmatpush1.bf16.msra.mxu0 %v400
    %1307 = vmatprep.subr.bf16.mxu0 %v405
    %1308 = vmatpush1.bf16.msra.mxu0 %v404
    %1309 = vmatprep.subr.bf16.mxu0 %v409
    %1310 = vmatpush1.bf16.msra.mxu0 %v408
    %1311 = vmatprep.subr.bf16.mxu0 %v413
    %1312 = vmatpush1.bf16.msra.mxu0 %v412
    %1313 = vmatprep.subr.bf16.mxu0 0
    %1314 = vmatpush1.bf16.msra.mxu0 0
    %1315 = vmatprep.subr.bf16.mxu0 0
    %1316 = vmatpush1.bf16.msra.mxu0 0
    %1317 = vmatprep.subr.bf16.mxu0 0
    %1318 = vmatpush1.bf16.msra.mxu0 0
    %1319 = vmatprep.subr.bf16.mxu0 0
    %1320 = vmatpush1.bf16.msra.mxu0 0
    %1321 = vmatprep.subr.bf16.mxu0 0
    %1322 = vmatpush1.bf16.msra.mxu0 0
    %1323 = vmatprep.subr.bf16.mxu0 0
    %1324 = vmatpush1.bf16.msra.mxu0 0
    %1325 = vmatprep.subr.bf16.mxu0 0
    %1326 = vmatpush1.bf16.msra.mxu0 0
    %1327 = vmatprep.subr.bf16.mxu0 0
    %1328 = vmatpush1.bf16.msra.mxu0 0
    %1329 = vmatprep.mubr.bf16.mxu0 0
    %1330 = vmatmul.mubr.bf16.gmra.mrb[0].mxu0 %v1255
    %v1331 = vpop.f32.mrb[0].mxu0
    %v1332 = vadd.f32 0.0, %v1331
    %v1333 = vpop.f32.mrb[0].mxu0
    %v1334 = vadd.f32 0.0, %v1333
    %v1335 = vpop.f32.mrb[0].mxu0
    %v1336 = vpop.f32.mrb[0].mxu0
    %1337 = vdwg.mxu0
    %v1342 = vcombine.low %v1291, %v1293
    %v1343 = vcombine.low %v1332, %v1334
    %v1345 = vunpack.c.l.s4 1966171168
    %v1346 = vunpack.c.0.s8 %v1345
    %v1347 = vlaneseq
    %v1348 = vshrl.u32 %v1347, 7
    %v1349 = vsub.s32 %v1346, %v1348
    %v1350 = vrot.slane %v1342, %v1349
    %v1352 = vunpack.c.l.s4 1966171168
    %v1353 = vunpack.c.0.s8 %v1352
    %v1354 = vlaneseq
    %v1355 = vshrl.u32 %v1354, 7
    %v1356 = vsub.s32 %v1353, %v1355
    %v1357 = vrot.slane %v1343, %v1356
    %v1358 = vcombine.low %v1350, %v1357
    %v1360 = vunpack.c.l.s4 1966171168
    %v1361 = vunpack.c.0.s8 %v1360
    %v1362 = vlaneseq
    %v1363 = vshrl.u32 %v1362, 7
    %v1364 = vsub.s32 %v1361, %v1363
    %v1365 = vrot.slane %v1358, %v1364
    %v1367 = vadd.f32 %v1254, %v1365
    %v1368 = vxor.u32 %v1367, 2147483648
    %v1369 = vmul.f32 %v1368, 1.442695
    %v1370 = vpow.pop %v1369
    %v1371 = vadd.f32 %v1370, 1.0
    %v1372 = vrcp.pop %v1371
    %v1373 = vmul.f32 1.0, %v1372
    %v1375 = vrot.slane %v1367, 3
    %v1377 = vtanh.pop %v1375
    %v1379 = vrot.slane %v1373, 1
    %v1381 = vmul.f32 %v1379, %v1248
    %v1382 = vmul.f32 %v1373, %v1377
    %v1383 = vadd.f32 %v1381, %v1382
    %v1384 = vtanh.pop %v1383
    %v1385 = vrot.slane %v1373, 2
    %v1387 = vmul.f32 %v1385, %v1384
    %s1388 = scalar_lea.vmem [#allocation2], 7
    %v1389 = vld [vmem:[%s1388] ss:$8 sm:$0xf]
    %v1390 = vpack.c.bf16 %v1387, %v1387
    %1391 = vmatprep.subr.bf16.mxu0 %v383
    %1392 = vmatpush1.bf16.msra.mxu0 %v382
    %1393 = vmatprep.subr.bf16.mxu0 %v387
    %1394 = vmatpush1.bf16.msra.mxu0 %v386
    %1395 = vmatprep.subr.bf16.mxu0 %v391
    %1396 = vmatpush1.bf16.msra.mxu0 %v390
    %1397 = vmatprep.subr.bf16.mxu0 %v395
    %1398 = vmatpush1.bf16.msra.mxu0 %v394
    %1399 = vmatprep.subr.bf16.mxu0 %v399
    %1400 = vmatpush1.bf16.msra.mxu0 %v398
    %1401 = vmatprep.subr.bf16.mxu0 %v403
    %1402 = vmatpush1.bf16.msra.mxu0 %v402
    %1403 = vmatprep.subr.bf16.mxu0 %v407
    %1404 = vmatpush1.bf16.msra.mxu0 %v406
    %1405 = vmatprep.subr.bf16.mxu0 %v411
    %1406 = vmatpush1.bf16.msra.mxu0 %v410
    %1407 = vmatprep.subr.bf16.mxu0 0
    %1408 = vmatpush1.bf16.msra.mxu0 0
    %1409 = vmatprep.subr.bf16.mxu0 0
    %1410 = vmatpush1.bf16.msra.mxu0 0
    %1411 = vmatprep.subr.bf16.mxu0 0
    %1412 = vmatpush1.bf16.msra.mxu0 0
    %1413 = vmatprep.subr.bf16.mxu0 0
    %1414 = vmatpush1.bf16.msra.mxu0 0
    %1415 = vmatprep.subr.bf16.mxu0 0
    %1416 = vmatpush1.bf16.msra.mxu0 0
    %1417 = vmatprep.subr.bf16.mxu0 0
    %1418 = vmatpush1.bf16.msra.mxu0 0
    %1419 = vmatprep.subr.bf16.mxu0 0
    %1420 = vmatpush1.bf16.msra.mxu0 0
    %1421 = vmatprep.subr.bf16.mxu0 0
    %1422 = vmatpush1.bf16.msra.mxu0 0
    %1423 = vmatprep.mubr.bf16.mxu0 0
    %1424 = vmatmul.mubr.bf16.gmra.mrb[0].mxu0 %v1390
    %v1425 = vpop.f32.mrb[0].mxu0
    %v1426 = vadd.f32 0.0, %v1425
    %v1427 = vpop.f32.mrb[0].mxu0
    %v1428 = vadd.f32 0.0, %v1427
    %v1429 = vpop.f32.mrb[0].mxu0
    %v1430 = vpop.f32.mrb[0].mxu0
    %1431 = vdwg.mxu0
    %1432 = vmatprep.subr.bf16.mxu0 %v385
    %1433 = vmatpush1.bf16.msra.mxu0 %v384
    %1434 = vmatprep.subr.bf16.mxu0 %v389
    %1435 = vmatpush1.bf16.msra.mxu0 %v388
    %1436 = vmatprep.subr.bf16.mxu0 %v393
    %1437 = vmatpush1.bf16.msra.mxu0 %v392
    %1438 = vmatprep.subr.bf16.mxu0 %v397
    %1439 = vmatpush1.bf16.msra.mxu0 %v396
    %1440 = vmatprep.subr.bf16.mxu0 %v401
    %1441 = vmatpush1.bf16.msra.mxu0 %v400
    %1442 = vmatprep.subr.bf16.mxu0 %v405
    %1443 = vmatpush1.bf16.msra.mxu0 %v404
    %1444 = vmatprep.subr.bf16.mxu0 %v409
    %1445 = vmatpush1.bf16.msra.mxu0 %v408
    %1446 = vmatprep.subr.bf16.mxu0 %v413
    %1447 = vmatpush1.bf16.msra.mxu0 %v412
    %1448 = vmatprep.subr.bf16.mxu0 0
    %1449 = vmatpush1.bf16.msra.mxu0 0
    %1450 = vmatprep.subr.bf16.mxu0 0
    %1451 = vmatpush1.bf16.msra.mxu0 0
    %1452 = vmatprep.subr.bf16.mxu0 0
    %1453 = vmatpush1.bf16.msra.mxu0 0
    %1454 = vmatprep.subr.bf16.mxu0 0
    %1455 = vmatpush1.bf16.msra.mxu0 0
    %1456 = vmatprep.subr.bf16.mxu0 0
    %1457 = vmatpush1.bf16.msra.mxu0 0
    %1458 = vmatprep.subr.bf16.mxu0 0
    %1459 = vmatpush1.bf16.msra.mxu0 0
    %1460 = vmatprep.subr.bf16.mxu0 0
    %1461 = vmatpush1.bf16.msra.mxu0 0
    %1462 = vmatprep.subr.bf16.mxu0 0
    %1463 = vmatpush1.bf16.msra.mxu0 0
    %1464 = vmatprep.mubr.bf16.mxu0 0
    %1465 = vmatmul.mubr.bf16.gmra.mrb[0].mxu0 %v1390
    %v1466 = vpop.f32.mrb[0].mxu0
    %v1467 = vadd.f32 0.0, %v1466
    %v1468 = vpop.f32.mrb[0].mxu0
    %v1469 = vadd.f32 0.0, %v1468
    %v1470 = vpop.f32.mrb[0].mxu0
    %v1471 = vpop.f32.mrb[0].mxu0
    %1472 = vdwg.mxu0
    %v1477 = vcombine.low %v1426, %v1428
    %v1478 = vcombine.low %v1467, %v1469
    %v1480 = vunpack.c.l.s4 1966171168
    %v1481 = vunpack.c.0.s8 %v1480
    %v1482 = vlaneseq
    %v1483 = vshrl.u32 %v1482, 7
    %v1484 = vsub.s32 %v1481, %v1483
    %v1485 = vrot.slane %v1477, %v1484
    %v1487 = vunpack.c.l.s4 1966171168
    %v1488 = vunpack.c.0.s8 %v1487
    %v1489 = vlaneseq
    %v1490 = vshrl.u32 %v1489, 7
    %v1491 = vsub.s32 %v1488, %v1490
    %v1492 = vrot.slane %v1478, %v1491
    %v1493 = vcombine.low %v1485, %v1492
    %v1495 = vunpack.c.l.s4 1966171168
    %v1496 = vunpack.c.0.s8 %v1495
    %v1497 = vlaneseq
    %v1498 = vshrl.u32 %v1497, 7
    %v1499 = vsub.s32 %v1496, %v1498
    %v1500 = vrot.slane %v1493, %v1499
    %v1502 = vadd.f32 %v1389, %v1500
    %v1503 = vxor.u32 %v1502, 2147483648
    %v1504 = vmul.f32 %v1503, 1.442695
    %v1505 = vpow.pop %v1504
    %v1506 = vadd.f32 %v1505, 1.0
    %v1507 = vrcp.pop %v1506
    %v1508 = vmul.f32 1.0, %v1507
    %v1510 = vrot.slane %v1502, 3
    %v1512 = vtanh.pop %v1510
    %v1514 = vrot.slane %v1508, 1
    %v1516 = vmul.f32 %v1514, %v1383
    %v1517 = vmul.f32 %v1508, %v1512
    %v1518 = vadd.f32 %v1516, %v1517
    %v1519 = vtanh.pop %v1518
    %v1520 = vrot.slane %v1508, 2
    %v1522 = vmul.f32 %v1520, %v1519
    %v1523 = vld [vmem:[#allocation6] sm:$0xff]
    %v1524 = vld [vmem:[#allocation6 + $0x8] sm:$0xff]
    %v1525 = vld [vmem:[#allocation6 + $0x10] sm:$0xff]
    %v1526 = vld [vmem:[#allocation6 + $0x18] sm:$0xff]
    %v1527 = vld [vmem:[#allocation6 + $0x20] sm:$0xff]
    %v1528 = vld [vmem:[#allocation6 + $0x28] sm:$0xff]
    %v1529 = vld [vmem:[#allocation6 + $0x30] sm:$0xff]
    %v1530 = vld [vmem:[#allocation6 + $0x38] sm:$0xff]
    %v1531 = vld [vmem:[#allocation6 + $0x40] sm:$0xff]
    %v1532 = vld [vmem:[#allocation6 + $0x48] sm:$0xff]
    %v1533 = vld [vmem:[#allocation6 + $0x50] sm:$0xff]
    %v1534 = vld [vmem:[#allocation6 + $0x58] sm:$0xff]
    %v1535 = vld [vmem:[#allocation6 + $0x60] sm:$0xff]
    %v1536 = vld [vmem:[#allocation6 + $0x68] sm:$0xff]
    %v1537 = vld [vmem:[#allocation6 + $0x70] sm:$0xff]
    %v1538 = vld [vmem:[#allocation6 + $0x78] sm:$0xff]
    %v1539 = vld [vmem:[%s5] sm:$0x1]
    %1540 = vmatprep.subr.mxu0 0.0
    %1541 = vmatpush1.msra.mxu0 %v1523
    %1542 = vmatprep.subr.mxu0 0.0
    %1543 = vmatpush1.msra.mxu0 %v1524
    %1544 = vmatprep.subr.mxu0 0.0
    %1545 = vmatpush1.msra.mxu0 %v1525
    %1546 = vmatprep.subr.mxu0 0.0
    %1547 = vmatpush1.msra.mxu0 %v1526
    %1548 = vmatprep.subr.mxu0 0.0
    %1549 = vmatpush1.msra.mxu0 %v1527
    %1550 = vmatprep.subr.mxu0 0.0
    %1551 = vmatpush1.msra.mxu0 %v1528
    %1552 = vmatprep.subr.mxu0 0.0
    %1553 = vmatpush1.msra.mxu0 %v1529
    %1554 = vmatprep.subr.mxu0 0.0
    %1555 = vmatpush1.msra.mxu0 %v1530
    %1556 = vmatprep.subr.mxu0 0.0
    %1557 = vmatpush1.msra.mxu0 %v1531
    %1558 = vmatprep.subr.mxu0 0.0
    %1559 = vmatpush1.msra.mxu0 %v1532
    %1560 = vmatprep.subr.mxu0 0.0
    %1561 = vmatpush1.msra.mxu0 %v1533
    %1562 = vmatprep.subr.mxu0 0.0
    %1563 = vmatpush1.msra.mxu0 %v1534
    %1564 = vmatprep.subr.mxu0 0.0
    %1565 = vmatpush1.msra.mxu0 %v1535
    %1566 = vmatprep.subr.mxu0 0.0
    %1567 = vmatpush1.msra.mxu0 %v1536
    %1568 = vmatprep.subr.mxu0 0.0
    %1569 = vmatpush1.msra.mxu0 %v1537
    %1570 = vmatprep.subr.mxu0 0.0
    %1571 = vmatpush1.msra.mxu0 %v1538
    %1572 = vmatprep.subr.mxu0 0.0
    %1573 = vmatpush1.msra.mxu0 0.0
    %1574 = vmatprep.subr.mxu0 0.0
    %1575 = vmatpush1.msra.mxu0 0.0
    %1576 = vmatprep.subr.mxu0 0.0
    %1577 = vmatpush1.msra.mxu0 0.0
    %1578 = vmatprep.subr.mxu0 0.0
    %1579 = vmatpush1.msra.mxu0 0.0
    %1580 = vmatprep.subr.mxu0 0.0
    %1581 = vmatpush1.msra.mxu0 0.0
    %1582 = vmatprep.subr.mxu0 0.0
    %1583 = vmatpush1.msra.mxu0 0.0
    %1584 = vmatprep.subr.mxu0 0.0
    %1585 = vmatpush1.msra.mxu0 0.0
    %1586 = vmatprep.subr.mxu0 0.0
    %1587 = vmatpush1.msra.mxu0 0.0
    %1588 = vmatprep.subr.mxu0 0.0
    %1589 = vmatpush1.msra.mxu0 0.0
    %1590 = vmatprep.subr.mxu0 0.0
    %1591 = vmatpush1.msra.mxu0 0.0
    %1592 = vmatprep.subr.mxu0 0.0
    %1593 = vmatpush1.msra.mxu0 0.0
    %1594 = vmatprep.subr.mxu0 0.0
    %1595 = vmatpush1.msra.mxu0 0.0
    %1596 = vmatprep.subr.mxu0 0.0
    %1597 = vmatpush1.msra.mxu0 0.0
    %1598 = vmatprep.subr.mxu0 0.0
    %1599 = vmatpush1.msra.mxu0 0.0
    %1600 = vmatprep.subr.mxu0 0.0
    %1601 = vmatpush1.msra.mxu0 0.0
    %1602 = vmatprep.subr.mxu0 0.0
    %1603 = vmatpush1.msra.mxu0 0.0
    %1604 = vmatprep.mubr.f32.mxu0 0.0
    %1605 = vmatmul.mubr.f32.gmra.mrb[0].mxu0 %v1522
    %v1606 = vpop.f32.mrb[0].mxu0
    %v1607 = vadd.f32 %v1539, %v1606
    %v1608 = vpop.f32.mrb[0].mxu0
    %1609 = vdwg.mxu0
    %1610 = vst [vmem:[#allocation8] sm:$0x1] %v1607
    // Predicated region
    $region34: #{tpu_custom_call.1} parent=1 // pred_check
      _
    $region35: #{tpu_custom_call.1} parent=1 // pred_check_branch
      %1612 = sbr.rel (0) target = $region37
    $region36: #{tpu_custom_call.1} parent=1 // pred_region
      %s1614 = ssub.s32 16, 16
      %1615 = vsyncadd [#allocation5], %s1614
      %s1617 = sshll.u32 [#allocation8], 4
      %s1618 = int_to_ptr.vmem [resolvable:$true] %s1617
      %1620 = dma.vmem_to_hbm [thread:$0]  %s1618, 16, %s6, [#allocation5]
    $region37: #{tpu_custom_call.1} parent=1 // pred_fallthru
      _
    // Predicated region
    $region38: #{tpu_custom_call.1} parent=1 // pred_check
      _
    $region39: #{tpu_custom_call.1} parent=1 // pred_check_branch
      %1622 = sbr.rel (0) target = $region41
    $region40: #{tpu_custom_call.1} parent=1 // pred_region
      %1623 = dma.done [#allocation5], 16
    $region41: #{tpu_custom_call.1} parent=1 // pred_fallthru
      _
    %1624 = vsyncpa [#allocation4], 1
    %1625 = vsyncpa [#allocation7], 1
    %1626 = vsyncpa [#allocation5], 1

</llo_original>
